<compile_context>
chip_gen: v5e
topology: v5e:2x2
jax: 0.10.0
libtpu: 0.0.40
codegen_flags: <defaults>
</compile_context>

<pallas_src>
import jax
import jax.numpy as jnp
from jax.experimental import pallas as pl
from jax.experimental.pallas import tpu as pltpu  # noqa: F401

# ---------------- model hyperparameters (small, consistent with the module) ----
N_NODES   = 16     # number of graph nodes
N_EDGES   = 48     # number of directed edges (unique (src,dst) pairs)
INPUT_DIM = 16     # data.x.size(1) after torch.cat((x, x_dtf), dim=1)
HIDDEN    = 32     # hidden_size (scaled down from 256)
HEADS     = 4      # heads
LAYER_NUM = 3      # layer_num
LEAKY_SLOPE = 0.2  # GATConv default negative_slope
BN_EPS = 1e-5
NEG_INF = -1e30

# per-layer (heads, channels): layers 0,1 -> (HEADS, HIDDEN); last -> (1, 2)
LAYER_HC = [(HEADS, HIDDEN), (HEADS, HIDDEN), (1, 2)]

# ------------------------------- packing layout --------------------------------
FIN_PAD   = 128   # padded input-feature rows of every layer's weight block
HC_PAD    = 128   # padded per-branch output lanes (gat half | skip half)
ATT_LANES = 128   # padded lanes of the per-layer head-expanded attention table
WAE_LANES = 256   # padded lanes of the concatenated edge-attention table

# graph-constant slab row offsets (bf16 slab -> offsets are multiples of 16)
G_D   = 0                         # D      [N, E]
G_MH  = G_D + N_NODES             # mask_h [N, HEADS*N]
G_ST  = G_MH + N_NODES            # S_T    [E, N]
G_STH = G_ST + N_EDGES            # ST_h   [E, HEADS*N]
G_R   = G_STH + N_EDGES           # R      [HEADS*N, N]
G_BD  = G_R + HEADS * N_NODES     # BD     [HEADS*N, HEADS*HIDDEN]
G_ROWS = G_BD + HEADS * N_NODES
G_LANES = 128

# time/edge-mlp slab row offsets (f32 slab -> multiples of 8)
TE_TW, TE_TB, TE_EB, TE_EW = 0, 8, 16, 24
TE_ROWS = TE_EW + HIDDEN


# =============================== fused Pallas kernel ===========================

def _net_kernel(x_ref, t_ref, te_ref, wcat_ref, bcat_ref, attm_ref, wae_ref,
                g_ref, o_ref):
    f32 = jnp.float32
    bf16 = jnp.bfloat16
    N = N_NODES

    # ---- graph-structure constants (one packed bf16 slab, built in prep) ------
    D      = g_ref[G_D:G_D + N, 0:N_EDGES]                   # [N, E]  dst one-hot
    mask_h = g_ref[G_MH:G_MH + N, 0:HEADS * N]               # [N, hN] head-tiled adjacency
    S_T    = g_ref[G_ST:G_ST + N_EDGES, 0:N]                 # [E, N]  src one-hot
    ST_h   = g_ref[G_STH:G_STH + N_EDGES, 0:HEADS * N]       # [E, hN] head-tiled src one-hot
    R      = g_ref[G_R:G_R + HEADS * N, 0:N]                 # [hN, N] row-tiling one-hot
    BD     = g_ref[G_BD:G_BD + HEADS * N, :]                 # [hN, hc] block-diag head mask

    # ---- temporal encoding + edge message (all edges at once) -----------------
    t = t_ref[...]                                           # [E, 1] f32
    t_emb = jnp.cos(t * te_ref[TE_TW:TE_TW + 1, :] + te_ref[TE_TB:TE_TB + 1, :])
    emw = te_ref[TE_EW:TE_EW + HIDDEN, :].astype(bf16)
    edge_msg = (jnp.dot(t_emb.astype(bf16), emw, preferred_element_type=f32)
                + te_ref[TE_EB:TE_EB + 1, :])                # [E, HIDDEN] f32
    # edge-attention terms of ALL layers in one lane-dense matmul
    ae_all = jnp.dot(edge_msg.astype(bf16), wae_ref[...],
                     preferred_element_type=f32)             # [E, 256]

    x_b = x_ref[...].astype(bf16)                            # [N, 128]
    x_f = x_ref[...]
    ae_off = 0
    for li, (h, c) in enumerate(LAYER_HC):
        hc = h * c
        hN = h * N

        # fused (BN-folded) GAT-lin | skip-lin projection: one lane-dense matmul
        w_cat = wcat_ref[li * FIN_PAD:(li + 1) * FIN_PAD, :]          # bf16 [128, 256]
        bias = bcat_ref[li * 8:li * 8 + 1, :]                         # f32  [1, 256]
        proj = jnp.dot(x_b, w_cat, preferred_element_type=f32) + bias
        xp = proj[:, 0:HC_PAD]                                        # [N, 128] GAT branch
        skip = proj[:, HC_PAD:2 * HC_PAD]                             # [N, 128] skip (+biases)
        xp_b = xp.astype(bf16)

        # per-node attention terms, already head-expanded to h*N lanes
        attm = attm_ref[li * HC_PAD:(li + 1) * HC_PAD, :]             # bf16 [128, 128]
        att = jnp.dot(xp_b, attm, preferred_element_type=f32)         # [N, 128]
        a_src = att[:, 0:hN]                                          # [N, hN]
        a_dst = att[:, hN:2 * hN]                                     # [N, hN]

        # per-edge term (edge attention + folded source term), head-expanded
        ae = ae_all[:, ae_off:ae_off + hN]                            # [E, hN]
        ec = ae + jnp.dot(S_T, a_src.astype(bf16), preferred_element_type=f32)
        sth = ST_h if h > 1 else S_T
        ml = mask_h if h > 1 else mask_h[:, 0:N]
        # scatter -> one-hot matmul: all heads' logits in one [N, hN] slab
        e_term = jnp.dot(D, ec.astype(bf16) * sth, preferred_element_type=f32)

        s = a_dst + e_term
        s = jnp.maximum(s, LEAKY_SLOPE * s)                           # LeakyReLU(0.2)
        s = jnp.where(ml > 0.5, s, NEG_INF)                           # mask non-edges
        # grouped softmax (per dst node / head): a shared per-row shift is exact;
        # clamp at 0 so masked (-1e30) lanes go to 0 after exp (no extra mask mul).
        m = jnp.maximum(jnp.max(s, axis=-1, keepdims=True), 0.0)
        p = jnp.exp(s - m)                                            # [N, hN] f32
        p_b = p.astype(bf16)

        if h == 1:
            den = jnp.sum(p, axis=-1, keepdims=True)                  # [N, 1]
            raw = jnp.dot(p_b, xp_b, preferred_element_type=f32)      # [N, 128]
        else:
            # per-head-masked xp slab: (R @ xp) tiled per head, block-diag masked
            xp_blk = (jnp.dot(R, xp_b, preferred_element_type=f32)
                      .astype(bf16) * BD)                             # [hN, 128]
            raw = jnp.dot(p_b, xp_blk, preferred_element_type=f32)    # [N, 128]
            den = jnp.dot(p_b, BD, preferred_element_type=f32)        # [N, 128] per-head sums
        gat = raw * pl.reciprocal(jnp.where(den > 0.0, den, 1.0), approx=True)

        x_f = jnp.maximum(skip + gat, 0.0)                            # relu(skip + GAT + bias)
        x_b = x_f.astype(bf16)
        ae_off += hN

    o_ref[...] = x_f                                                  # [N, 128] lane-dense store


# ============================ parameter preparation ============================

def prepare_params(params, edge_index, num_nodes=N_NODES):
    """Fold eval-mode BN + biases, head-expand attention tables, pack into slabs,
    and hoist all graph-structure one-hot constants out of the per-call path."""
    f32, bf16 = jnp.float32, jnp.bfloat16
    H = HIDDEN
    n_edges = edge_index.shape[1]

    # --- time-encoder / edge-MLP slab (f32) ---
    te = jnp.zeros((TE_ROWS, H), f32)
    te = te.at[TE_TW, :].set(params["time_w"].reshape(H))
    te = te.at[TE_TB, :].set(params["time_b"].reshape(H))
    te = te.at[TE_EB, :].set(params["edge_mlp_b"].reshape(H))
    te = te.at[TE_EW:TE_EW + H, :].set(params["edge_mlp_w"])

    # --- per-layer folded weights packed into shared slabs ---
    wcat_blocks, bcat_blocks, attm_blocks, wae_cols = [], [], [], []
    for lp in params["layers"]:
        gp = lp["gat"]
        h, c = gp["att_src"].shape
        hc = h * c
        hN = h * num_nodes
        f_in = lp["skip_w"].shape[0]

        scale = lp["bn_gamma"] * jax.lax.rsqrt(lp["bn_var"] + BN_EPS)
        shift = lp["bn_beta"] - lp["bn_mean"] * scale
        w_gat = scale[:, None] * gp["w"]                       # [F_in, hc]
        b_gat = shift @ gp["w"]                                # [hc]
        w_skip = scale[:, None] * lp["skip_w"]                 # [F_in, hc]
        b_skip = shift @ lp["skip_w"] + lp["skip_b"] + gp["bias"]   # GAT bias folded here

        wcat = jnp.zeros((FIN_PAD, 2 * HC_PAD), f32)
        wcat = wcat.at[:f_in, :hc].set(w_gat)
        wcat = wcat.at[:f_in, HC_PAD:HC_PAD + hc].set(w_skip)
        wcat_blocks.append(wcat)

        bcat = jnp.zeros((8, 2 * HC_PAD), f32)
        bcat = bcat.at[0, :hc].set(b_gat)
        bcat = bcat.at[0, HC_PAD:HC_PAD + hc].set(b_skip)
        bcat_blocks.append(bcat)

        # head-expansion one-hot HE[hd, hd*N + j] = 1
        he = jnp.repeat(jnp.eye(h, dtype=f32), num_nodes, axis=1)      # [h, hN]
        a_src_m = jnp.zeros((hc, h), f32)
        a_dst_m = jnp.zeros((hc, h), f32)
        for hd in range(h):
            a_src_m = a_src_m.at[hd * c:(hd + 1) * c, hd].set(gp["att_src"][hd])
            a_dst_m = a_dst_m.at[hd * c:(hd + 1) * c, hd].set(gp["att_dst"][hd])
        att_exp = jnp.concatenate([a_src_m @ he, a_dst_m @ he], axis=1)  # [hc, 2*hN]
        attm = jnp.zeros((HC_PAD, ATT_LANES), f32)
        attm = attm.at[:hc, :2 * hN].set(att_exp)
        attm_blocks.append(attm)

        w_ae = jnp.stack([gp["w_edge"][:, hd * c:(hd + 1) * c] @ gp["att_edge"][hd]
                          for hd in range(h)], axis=1)                  # [H, h]
        wae_cols.append(w_ae @ he)                                      # [H, hN]

    wae_cat = jnp.concatenate(wae_cols, axis=1)                         # [H, 64+64+16]
    wae = jnp.zeros((H, WAE_LANES), f32).at[:, :wae_cat.shape[1]].set(wae_cat)

    # --- graph-structure constants (hoisted out of the per-call path) ---
    src, dst = edge_index[0], edge_index[1]
    ids = jnp.arange(num_nodes, dtype=edge_index.dtype)
    D = (dst[None, :] == ids[:, None]).astype(f32)                      # [N, E]
    S_T = (src[:, None] == ids[None, :]).astype(f32)                    # [E, N]
    mask = (D @ S_T > 0.5).astype(f32)                                  # [N, N]
    g = jnp.zeros((G_ROWS, G_LANES), f32)
    g = g.at[G_D:G_D + num_nodes, :n_edges].set(D)
    g = g.at[G_MH:G_MH + num_nodes, :HEADS * num_nodes].set(jnp.tile(mask, (1, HEADS)))
    g = g.at[G_ST:G_ST + n_edges, :num_nodes].set(S_T)
    g = g.at[G_STH:G_STH + n_edges, :HEADS * num_nodes].set(jnp.tile(S_T, (1, HEADS)))
    g = g.at[G_R:G_R + HEADS * num_nodes, :num_nodes].set(
        jnp.tile(jnp.eye(num_nodes, dtype=f32), (HEADS, 1)))
    g = g.at[G_BD:G_BD + HEADS * num_nodes, :HEADS * HIDDEN].set(
        jnp.kron(jnp.eye(HEADS, dtype=f32), jnp.ones((num_nodes, HIDDEN), f32)))

    return {
        "te": te,                                                       # [56, 32]  f32
        "wcat": jnp.concatenate(wcat_blocks, axis=0).astype(bf16),      # [384, 256] bf16
        "bcat": jnp.concatenate(bcat_blocks, axis=0),                   # [24, 256] f32
        "attm": jnp.concatenate(attm_blocks, axis=0).astype(bf16),      # [384, 128] bf16
        "wae": wae.astype(bf16),                                        # [32, 256] bf16
        "gconst": g.astype(bf16),                                       # [256, 128] bf16
    }


# ================================ full forward =================================

def net_forward(prepped, x, edge_attr):
    n = x.shape[0]
    x_pad = jnp.zeros((n, HC_PAD), jnp.float32).at[:, :x.shape[1]].set(x)
    out = pl.pallas_call(
        _net_kernel,
        out_shape=jax.ShapeDtypeStruct((n, HC_PAD), jnp.float32),
    )(x_pad, edge_attr, prepped["te"], prepped["wcat"], prepped["bcat"],
      prepped["attm"], prepped["wae"], prepped["gconst"])
    out_dim = LAYER_HC[-1][0] * LAYER_HC[-1][1]
    return out[:, :out_dim]


# =============================== parameter init ================================

def make_params(key):
    keys = iter(jax.random.split(key, 128))

    def gl(shape):
        fan_in = shape[0]
        fan_out = shape[-1]
        lim = (6.0 / (fan_in + fan_out)) ** 0.5
        return jax.random.uniform(next(keys), shape, jnp.float32, -lim, lim)

    params = {
        "time_w": gl((HIDDEN, 1)).reshape(HIDDEN),
        "time_b": gl((HIDDEN, 1)).reshape(HIDDEN),
        "edge_mlp_w": gl((HIDDEN, HIDDEN)),
        "edge_mlp_b": jnp.zeros((HIDDEN,), jnp.float32),
        "layers": [],
    }

    dims_in = [INPUT_DIM, HIDDEN * HEADS, HIDDEN * HEADS]
    for i in range(LAYER_NUM):
        f_in = dims_in[i]
        h, c = LAYER_HC[i]
        layer = {
            # BatchNorm1d eval-mode stats/affine (freshly initialized values)
            "bn_gamma": jnp.ones((f_in,), jnp.float32),
            "bn_beta": jnp.zeros((f_in,), jnp.float32),
            "bn_mean": jnp.zeros((f_in,), jnp.float32),
            "bn_var": jnp.ones((f_in,), jnp.float32),
            "skip_w": gl((f_in, h * c)),
            "skip_b": jnp.zeros((h * c,), jnp.float32),
            "gat": {
                "w": gl((f_in, h * c)),
                "w_edge": gl((HIDDEN, h * c)),
                "att_src": gl((h, c)),
                "att_dst": gl((h, c)),
                "att_edge": gl((h, c)),
                "bias": jnp.zeros((h * c,), jnp.float32),
            },
        }
        params["layers"].append(layer)
    return params


# ==================================== main =====================================

if __name__ == "__main__":
    key = jax.random.PRNGKey(0)
    kx, ke, kp = jax.random.split(key, 3)

    x = jax.random.normal(kx, (N_NODES, INPUT_DIM), jnp.float32)

    # deterministic unique directed edges: i -> (i + k) % N for k = 1..3
    srcs, dsts = [], []
    for k in range(1, 4):
        for i in range(N_NODES):
            srcs.append(i)
            dsts.append((i + k) % N_NODES)
    edge_index = jnp.array([srcs, dsts], dtype=jnp.int32)             # [2, E]
    edge_attr = jax.random.uniform(ke, (N_EDGES, 1), jnp.float32) * 10.0

    params = make_params(kp)
    prepped = prepare_params(params, edge_index)

    fwd = jax.jit(net_forward)
    out = fwd(prepped, x, edge_attr)
    out = jax.block_until_ready(out)

    assert out.shape == (N_NODES, 2), out.shape
    assert bool(jnp.all(jnp.isfinite(out)))
    print("KERNEL_OK")
</pallas_src>

<mosaic_0001>
module attributes {stable_mosaic.version = 11 : i64} {
  func.func @_net_kernel(%arg0: memref<16x128xf32, #tpu.memory_space<vmem>>, %arg1: memref<48x1xf32, #tpu.memory_space<vmem>>, %arg2: memref<56x32xf32, #tpu.memory_space<vmem>>, %arg3: memref<384x256xbf16, #tpu.memory_space<vmem>>, %arg4: memref<24x256xf32, #tpu.memory_space<vmem>>, %arg5: memref<384x128xbf16, #tpu.memory_space<vmem>>, %arg6: memref<32x256xbf16, #tpu.memory_space<vmem>>, %arg7: memref<256x128xbf16, #tpu.memory_space<vmem>>, %arg8: memref<16x128xf32, #tpu.memory_space<vmem>>) attributes {dimension_semantics = [], scalar_prefetch = 0 : i64, scratch_operands = 0 : i64, tpu.core_type = #tpu.core_type<tc>} {
    %c0 = arith.constant 0 : index
    %c0_0 = arith.constant 0 : index
    %0 = vector.load %arg7[%c0, %c0_0] : memref<256x128xbf16, #tpu.memory_space<vmem>>, vector<16x48xbf16>
    %c16 = arith.constant 16 : index
    %c0_1 = arith.constant 0 : index
    %1 = vector.load %arg7[%c16, %c0_1] : memref<256x128xbf16, #tpu.memory_space<vmem>>, vector<16x64xbf16>
    %c32 = arith.constant 32 : index
    %c0_2 = arith.constant 0 : index
    %2 = vector.load %arg7[%c32, %c0_2] : memref<256x128xbf16, #tpu.memory_space<vmem>>, vector<48x16xbf16>
    %c80 = arith.constant 80 : index
    %c0_3 = arith.constant 0 : index
    %3 = vector.load %arg7[%c80, %c0_3] : memref<256x128xbf16, #tpu.memory_space<vmem>>, vector<48x64xbf16>
    %c128 = arith.constant 128 : index
    %c0_4 = arith.constant 0 : index
    %4 = vector.load %arg7[%c128, %c0_4] : memref<256x128xbf16, #tpu.memory_space<vmem>>, vector<64x16xbf16>
    %c192 = arith.constant 192 : index
    %c0_5 = arith.constant 0 : index
    %5 = vector.load %arg7[%c192, %c0_5] : memref<256x128xbf16, #tpu.memory_space<vmem>>, vector<64x128xbf16>
    %c0_6 = arith.constant 0 : index
    %c0_7 = arith.constant 0 : index
    %6 = vector.load %arg1[%c0_6, %c0_7] : memref<48x1xf32, #tpu.memory_space<vmem>>, vector<48x1xf32>
    %c0_8 = arith.constant 0 : index
    %c0_9 = arith.constant 0 : index
    %7 = vector.load %arg2[%c0_8, %c0_9] : memref<56x32xf32, #tpu.memory_space<vmem>>, vector<1x32xf32>
    %8 = vector.broadcast %6 : vector<48x1xf32> to vector<48x32xf32>
    %9 = vector.broadcast %7 : vector<1x32xf32> to vector<48x32xf32>
    %10 = arith.mulf %8, %9 : vector<48x32xf32>
    %c8 = arith.constant 8 : index
    %c0_10 = arith.constant 0 : index
    %11 = vector.load %arg2[%c8, %c0_10] : memref<56x32xf32, #tpu.memory_space<vmem>>, vector<1x32xf32>
    %12 = vector.broadcast %11 : vector<1x32xf32> to vector<48x32xf32>
    %13 = arith.addf %10, %12 : vector<48x32xf32>
    %14 = math.cos %13 : vector<48x32xf32>
    %c24 = arith.constant 24 : index
    %c0_11 = arith.constant 0 : index
    %15 = vector.load %arg2[%c24, %c0_11] : memref<56x32xf32, #tpu.memory_space<vmem>>, vector<32x32xf32>
    %16 = arith.truncf %15 : vector<32x32xf32> to vector<32x32xbf16>
    %17 = arith.truncf %14 : vector<48x32xf32> to vector<48x32xbf16>
    %cst = arith.constant dense<0.000000e+00> : vector<48x32xf32>
    %18 = tpu.matmul %17, %16, %cst {dimension_numbers = #tpu.dot_dimension_numbers<[1], [0], [0], [1], [0, 0, 1, 1], [], []>} : vector<48x32xbf16>, vector<32x32xbf16>, vector<48x32xf32> -> vector<48x32xf32>
    %c16_12 = arith.constant 16 : index
    %c0_13 = arith.constant 0 : index
    %19 = vector.load %arg2[%c16_12, %c0_13] : memref<56x32xf32, #tpu.memory_space<vmem>>, vector<1x32xf32>
    %20 = vector.broadcast %19 : vector<1x32xf32> to vector<48x32xf32>
    %21 = arith.addf %18, %20 : vector<48x32xf32>
    %22 = arith.truncf %21 : vector<48x32xf32> to vector<48x32xbf16>
    %c0_14 = arith.constant 0 : index
    %c0_15 = arith.constant 0 : index
    %23 = vector.load %arg6[%c0_14, %c0_15] : memref<32x256xbf16, #tpu.memory_space<vmem>>, vector<32x256xbf16>
    %cst_16 = arith.constant dense<0.000000e+00> : vector<48x256xf32>
    %24 = tpu.matmul %22, %23, %cst_16 {dimension_numbers = #tpu.dot_dimension_numbers<[1], [0], [0], [1], [0, 0, 1, 1], [], []>} : vector<48x32xbf16>, vector<32x256xbf16>, vector<48x256xf32> -> vector<48x256xf32>
    %c0_17 = arith.constant 0 : index
    %c0_18 = arith.constant 0 : index
    %25 = vector.load %arg0[%c0_17, %c0_18] : memref<16x128xf32, #tpu.memory_space<vmem>>, vector<16x128xf32>
    %26 = arith.truncf %25 : vector<16x128xf32> to vector<16x128xbf16>
    %c0_19 = arith.constant 0 : index
    %c0_20 = arith.constant 0 : index
    %27 = vector.load %arg3[%c0_19, %c0_20] : memref<384x256xbf16, #tpu.memory_space<vmem>>, vector<128x256xbf16>
    %c0_21 = arith.constant 0 : index
    %c0_22 = arith.constant 0 : index
    %28 = vector.load %arg4[%c0_21, %c0_22] : memref<24x256xf32, #tpu.memory_space<vmem>>, vector<1x256xf32>
    %cst_23 = arith.constant dense<0.000000e+00> : vector<16x256xf32>
    %29 = tpu.matmul %26, %27, %cst_23 {dimension_numbers = #tpu.dot_dimension_numbers<[1], [0], [0], [1], [0, 0, 1, 1], [], []>} : vector<16x128xbf16>, vector<128x256xbf16>, vector<16x256xf32> -> vector<16x256xf32>
    %30 = vector.broadcast %28 : vector<1x256xf32> to vector<16x256xf32>
    %31 = arith.addf %29, %30 : vector<16x256xf32>
    %32 = vector.extract_strided_slice %31 {offsets = [0, 0], sizes = [16, 128], strides = [1, 1]} : vector<16x256xf32> to vector<16x128xf32>
    %33 = vector.extract_strided_slice %31 {offsets = [0, 128], sizes = [16, 128], strides = [1, 1]} : vector<16x256xf32> to vector<16x128xf32>
    %34 = arith.truncf %32 : vector<16x128xf32> to vector<16x128xbf16>
    %c0_24 = arith.constant 0 : index
    %c0_25 = arith.constant 0 : index
    %35 = vector.load %arg5[%c0_24, %c0_25] : memref<384x128xbf16, #tpu.memory_space<vmem>>, vector<128x128xbf16>
    %cst_26 = arith.constant dense<0.000000e+00> : vector<16x128xf32>
    %36 = tpu.matmul %34, %35, %cst_26 {dimension_numbers = #tpu.dot_dimension_numbers<[1], [0], [0], [1], [0, 0, 1, 1], [], []>} : vector<16x128xbf16>, vector<128x128xbf16>, vector<16x128xf32> -> vector<16x128xf32>
    %37 = vector.extract_strided_slice %36 {offsets = [0, 0], sizes = [16, 64], strides = [1, 1]} : vector<16x128xf32> to vector<16x64xf32>
    %38 = vector.extract_strided_slice %36 {offsets = [0, 64], sizes = [16, 64], strides = [1, 1]} : vector<16x128xf32> to vector<16x64xf32>
    %39 = vector.extract_strided_slice %24 {offsets = [0, 0], sizes = [48, 64], strides = [1, 1]} : vector<48x256xf32> to vector<48x64xf32>
    %40 = arith.truncf %37 : vector<16x64xf32> to vector<16x64xbf16>
    %cst_27 = arith.constant dense<0.000000e+00> : vector<48x64xf32>
    %41 = tpu.matmul %2, %40, %cst_27 {dimension_numbers = #tpu.dot_dimension_numbers<[1], [0], [0], [1], [0, 0, 1, 1], [], []>} : vector<48x16xbf16>, vector<16x64xbf16>, vector<48x64xf32> -> vector<48x64xf32>
    %42 = arith.addf %39, %41 : vector<48x64xf32>
    %43 = arith.truncf %42 : vector<48x64xf32> to vector<48x64xbf16>
    %44 = arith.mulf %43, %3 : vector<48x64xbf16>
    %cst_28 = arith.constant dense<0.000000e+00> : vector<16x64xf32>
    %45 = tpu.matmul %0, %44, %cst_28 {dimension_numbers = #tpu.dot_dimension_numbers<[1], [0], [0], [1], [0, 0, 1, 1], [], []>} : vector<16x48xbf16>, vector<48x64xbf16>, vector<16x64xf32> -> vector<16x64xf32>
    %46 = arith.addf %38, %45 : vector<16x64xf32>
    %cst_29 = arith.constant 2.000000e-01 : f32
    %47 = vector.broadcast %cst_29 : f32 to vector<16x64xf32>
    %48 = arith.mulf %47, %46 : vector<16x64xf32>
    %49 = arith.maximumf %46, %48 : vector<16x64xf32>
    %cst_30 = arith.constant 5.000000e-01 : bf16
    %50 = vector.broadcast %cst_30 : bf16 to vector<16x64xbf16>
    %51 = arith.cmpf ogt, %1, %50 : vector<16x64xbf16>
    %cst_31 = arith.constant -1.000000e+30 : f32
    %52 = vector.broadcast %cst_31 : f32 to vector<16x64xf32>
    %53 = arith.select %51, %49, %52 : vector<16x64xi1>, vector<16x64xf32>
    %cst_32 = arith.constant dense<0xFF800000> : vector<16xf32>
    %54 = vector.multi_reduction <maximumf>, %53, %cst_32 [1] : vector<16x64xf32> to vector<16xf32>
    %55 = vector.shape_cast %54 : vector<16xf32> to vector<16x1xf32>
    %cst_33 = arith.constant 0.000000e+00 : f32
    %56 = vector.broadcast %cst_33 : f32 to vector<16x1xf32>
    %57 = arith.maximumf %55, %56 : vector<16x1xf32>
    %58 = vector.broadcast %57 : vector<16x1xf32> to vector<16x64xf32>
    %59 = arith.subf %53, %58 : vector<16x64xf32>
    %60 = math.exp %59 : vector<16x64xf32>
    %61 = arith.truncf %60 : vector<16x64xf32> to vector<16x64xbf16>
    %cst_34 = arith.constant dense<0.000000e+00> : vector<64x128xf32>
    %62 = tpu.matmul %4, %34, %cst_34 {dimension_numbers = #tpu.dot_dimension_numbers<[1], [0], [0], [1], [0, 0, 1, 1], [], []>} : vector<64x16xbf16>, vector<16x128xbf16>, vector<64x128xf32> -> vector<64x128xf32>
    %63 = arith.truncf %62 : vector<64x128xf32> to vector<64x128xbf16>
    %64 = arith.mulf %63, %5 : vector<64x128xbf16>
    %cst_35 = arith.constant dense<0.000000e+00> : vector<16x128xf32>
    %65 = tpu.matmul %61, %64, %cst_35 {dimension_numbers = #tpu.dot_dimension_numbers<[1], [0], [0], [1], [0, 0, 1, 1], [], []>} : vector<16x64xbf16>, vector<64x128xbf16>, vector<16x128xf32> -> vector<16x128xf32>
    %cst_36 = arith.constant dense<0.000000e+00> : vector<16x128xf32>
    %66 = tpu.matmul %61, %5, %cst_36 {dimension_numbers = #tpu.dot_dimension_numbers<[1], [0], [0], [1], [0, 0, 1, 1], [], []>} : vector<16x64xbf16>, vector<64x128xbf16>, vector<16x128xf32> -> vector<16x128xf32>
    %cst_37 = arith.constant 0.000000e+00 : f32
    %67 = vector.broadcast %cst_37 : f32 to vector<16x128xf32>
    %68 = arith.cmpf ogt, %66, %67 : vector<16x128xf32>
    %cst_38 = arith.constant 1.000000e+00 : f32
    %69 = vector.broadcast %cst_38 : f32 to vector<16x128xf32>
    %70 = arith.select %68, %66, %69 : vector<16x128xi1>, vector<16x128xf32>
    %71 = tpu.reciprocal %70 {approx = true} : vector<16x128xf32> -> vector<16x128xf32>
    %72 = arith.mulf %65, %71 : vector<16x128xf32>
    %73 = arith.addf %33, %72 : vector<16x128xf32>
    %cst_39 = arith.constant 0.000000e+00 : f32
    %74 = vector.broadcast %cst_39 : f32 to vector<16x128xf32>
    %75 = arith.maximumf %73, %74 : vector<16x128xf32>
    %76 = arith.truncf %75 : vector<16x128xf32> to vector<16x128xbf16>
    %c128_40 = arith.constant 128 : index
    %c0_41 = arith.constant 0 : index
    %77 = vector.load %arg3[%c128_40, %c0_41] : memref<384x256xbf16, #tpu.memory_space<vmem>>, vector<128x256xbf16>
    %c8_42 = arith.constant 8 : index
    %c0_43 = arith.constant 0 : index
    %78 = vector.load %arg4[%c8_42, %c0_43] : memref<24x256xf32, #tpu.memory_space<vmem>>, vector<1x256xf32>
    %cst_44 = arith.constant dense<0.000000e+00> : vector<16x256xf32>
    %79 = tpu.matmul %76, %77, %cst_44 {dimension_numbers = #tpu.dot_dimension_numbers<[1], [0], [0], [1], [0, 0, 1, 1], [], []>} : vector<16x128xbf16>, vector<128x256xbf16>, vector<16x256xf32> -> vector<16x256xf32>
    %80 = vector.broadcast %78 : vector<1x256xf32> to vector<16x256xf32>
    %81 = arith.addf %79, %80 : vector<16x256xf32>
    %82 = vector.extract_strided_slice %81 {offsets = [0, 0], sizes = [16, 128], strides = [1, 1]} : vector<16x256xf32> to vector<16x128xf32>
    %83 = vector.extract_strided_slice %81 {offsets = [0, 128], sizes = [16, 128], strides = [1, 1]} : vector<16x256xf32> to vector<16x128xf32>
    %84 = arith.truncf %82 : vector<16x128xf32> to vector<16x128xbf16>
    %c128_45 = arith.constant 128 : index
    %c0_46 = arith.constant 0 : index
    %85 = vector.load %arg5[%c128_45, %c0_46] : memref<384x128xbf16, #tpu.memory_space<vmem>>, vector<128x128xbf16>
    %cst_47 = arith.constant dense<0.000000e+00> : vector<16x128xf32>
    %86 = tpu.matmul %84, %85, %cst_47 {dimension_numbers = #tpu.dot_dimension_numbers<[1], [0], [0], [1], [0, 0, 1, 1], [], []>} : vector<16x128xbf16>, vector<128x128xbf16>, vector<16x128xf32> -> vector<16x128xf32>
    %87 = vector.extract_strided_slice %86 {offsets = [0, 0], sizes = [16, 64], strides = [1, 1]} : vector<16x128xf32> to vector<16x64xf32>
    %88 = vector.extract_strided_slice %86 {offsets = [0, 64], sizes = [16, 64], strides = [1, 1]} : vector<16x128xf32> to vector<16x64xf32>
    %89 = vector.extract_strided_slice %24 {offsets = [0, 64], sizes = [48, 64], strides = [1, 1]} : vector<48x256xf32> to vector<48x64xf32>
    %90 = arith.truncf %87 : vector<16x64xf32> to vector<16x64xbf16>
    %cst_48 = arith.constant dense<0.000000e+00> : vector<48x64xf32>
    %91 = tpu.matmul %2, %90, %cst_48 {dimension_numbers = #tpu.dot_dimension_numbers<[1], [0], [0], [1], [0, 0, 1, 1], [], []>} : vector<48x16xbf16>, vector<16x64xbf16>, vector<48x64xf32> -> vector<48x64xf32>
    %92 = arith.addf %89, %91 : vector<48x64xf32>
    %93 = arith.truncf %92 : vector<48x64xf32> to vector<48x64xbf16>
    %94 = arith.mulf %93, %3 : vector<48x64xbf16>
    %cst_49 = arith.constant dense<0.000000e+00> : vector<16x64xf32>
    %95 = tpu.matmul %0, %94, %cst_49 {dimension_numbers = #tpu.dot_dimension_numbers<[1], [0], [0], [1], [0, 0, 1, 1], [], []>} : vector<16x48xbf16>, vector<48x64xbf16>, vector<16x64xf32> -> vector<16x64xf32>
    %96 = arith.addf %88, %95 : vector<16x64xf32>
    %cst_50 = arith.constant 2.000000e-01 : f32
    %97 = vector.broadcast %cst_50 : f32 to vector<16x64xf32>
    %98 = arith.mulf %97, %96 : vector<16x64xf32>
    %99 = arith.maximumf %96, %98 : vector<16x64xf32>
    %cst_51 = arith.constant 5.000000e-01 : bf16
    %100 = vector.broadcast %cst_51 : bf16 to vector<16x64xbf16>
    %101 = arith.cmpf ogt, %1, %100 : vector<16x64xbf16>
    %cst_52 = arith.constant -1.000000e+30 : f32
    %102 = vector.broadcast %cst_52 : f32 to vector<16x64xf32>
    %103 = arith.select %101, %99, %102 : vector<16x64xi1>, vector<16x64xf32>
    %cst_53 = arith.constant dense<0xFF800000> : vector<16xf32>
    %104 = vector.multi_reduction <maximumf>, %103, %cst_53 [1] : vector<16x64xf32> to vector<16xf32>
    %105 = vector.shape_cast %104 : vector<16xf32> to vector<16x1xf32>
    %cst_54 = arith.constant 0.000000e+00 : f32
    %106 = vector.broadcast %cst_54 : f32 to vector<16x1xf32>
    %107 = arith.maximumf %105, %106 : vector<16x1xf32>
    %108 = vector.broadcast %107 : vector<16x1xf32> to vector<16x64xf32>
    %109 = arith.subf %103, %108 : vector<16x64xf32>
    %110 = math.exp %109 : vector<16x64xf32>
    %111 = arith.truncf %110 : vector<16x64xf32> to vector<16x64xbf16>
    %cst_55 = arith.constant dense<0.000000e+00> : vector<64x128xf32>
    %112 = tpu.matmul %4, %84, %cst_55 {dimension_numbers = #tpu.dot_dimension_numbers<[1], [0], [0], [1], [0, 0, 1, 1], [], []>} : vector<64x16xbf16>, vector<16x128xbf16>, vector<64x128xf32> -> vector<64x128xf32>
    %113 = arith.truncf %112 : vector<64x128xf32> to vector<64x128xbf16>
    %114 = arith.mulf %113, %5 : vector<64x128xbf16>
    %cst_56 = arith.constant dense<0.000000e+00> : vector<16x128xf32>
    %115 = tpu.matmul %111, %114, %cst_56 {dimension_numbers = #tpu.dot_dimension_numbers<[1], [0], [0], [1], [0, 0, 1, 1], [], []>} : vector<16x64xbf16>, vector<64x128xbf16>, vector<16x128xf32> -> vector<16x128xf32>
    %cst_57 = arith.constant dense<0.000000e+00> : vector<16x128xf32>
    %116 = tpu.matmul %111, %5, %cst_57 {dimension_numbers = #tpu.dot_dimension_numbers<[1], [0], [0], [1], [0, 0, 1, 1], [], []>} : vector<16x64xbf16>, vector<64x128xbf16>, vector<16x128xf32> -> vector<16x128xf32>
    %cst_58 = arith.constant 0.000000e+00 : f32
    %117 = vector.broadcast %cst_58 : f32 to vector<16x128xf32>
    %118 = arith.cmpf ogt, %116, %117 : vector<16x128xf32>
    %cst_59 = arith.constant 1.000000e+00 : f32
    %119 = vector.broadcast %cst_59 : f32 to vector<16x128xf32>
    %120 = arith.select %118, %116, %119 : vector<16x128xi1>, vector<16x128xf32>
    %121 = tpu.reciprocal %120 {approx = true} : vector<16x128xf32> -> vector<16x128xf32>
    %122 = arith.mulf %115, %121 : vector<16x128xf32>
    %123 = arith.addf %83, %122 : vector<16x128xf32>
    %cst_60 = arith.constant 0.000000e+00 : f32
    %124 = vector.broadcast %cst_60 : f32 to vector<16x128xf32>
    %125 = arith.maximumf %123, %124 : vector<16x128xf32>
    %126 = arith.truncf %125 : vector<16x128xf32> to vector<16x128xbf16>
    %c256 = arith.constant 256 : index
    %c0_61 = arith.constant 0 : index
    %127 = vector.load %arg3[%c256, %c0_61] : memref<384x256xbf16, #tpu.memory_space<vmem>>, vector<128x256xbf16>
    %c16_62 = arith.constant 16 : index
    %c0_63 = arith.constant 0 : index
    %128 = vector.load %arg4[%c16_62, %c0_63] : memref<24x256xf32, #tpu.memory_space<vmem>>, vector<1x256xf32>
    %cst_64 = arith.constant dense<0.000000e+00> : vector<16x256xf32>
    %129 = tpu.matmul %126, %127, %cst_64 {dimension_numbers = #tpu.dot_dimension_numbers<[1], [0], [0], [1], [0, 0, 1, 1], [], []>} : vector<16x128xbf16>, vector<128x256xbf16>, vector<16x256xf32> -> vector<16x256xf32>
    %130 = vector.broadcast %128 : vector<1x256xf32> to vector<16x256xf32>
    %131 = arith.addf %129, %130 : vector<16x256xf32>
    %132 = vector.extract_strided_slice %131 {offsets = [0, 0], sizes = [16, 128], strides = [1, 1]} : vector<16x256xf32> to vector<16x128xf32>
    %133 = vector.extract_strided_slice %131 {offsets = [0, 128], sizes = [16, 128], strides = [1, 1]} : vector<16x256xf32> to vector<16x128xf32>
    %134 = arith.truncf %132 : vector<16x128xf32> to vector<16x128xbf16>
    %c256_65 = arith.constant 256 : index
    %c0_66 = arith.constant 0 : index
    %135 = vector.load %arg5[%c256_65, %c0_66] : memref<384x128xbf16, #tpu.memory_space<vmem>>, vector<128x128xbf16>
    %cst_67 = arith.constant dense<0.000000e+00> : vector<16x128xf32>
    %136 = tpu.matmul %134, %135, %cst_67 {dimension_numbers = #tpu.dot_dimension_numbers<[1], [0], [0], [1], [0, 0, 1, 1], [], []>} : vector<16x128xbf16>, vector<128x128xbf16>, vector<16x128xf32> -> vector<16x128xf32>
    %137 = vector.extract_strided_slice %136 {offsets = [0, 0], sizes = [16, 16], strides = [1, 1]} : vector<16x128xf32> to vector<16x16xf32>
    %138 = vector.extract_strided_slice %136 {offsets = [0, 16], sizes = [16, 16], strides = [1, 1]} : vector<16x128xf32> to vector<16x16xf32>
    %139 = vector.extract_strided_slice %24 {offsets = [0, 128], sizes = [48, 16], strides = [1, 1]} : vector<48x256xf32> to vector<48x16xf32>
    %140 = arith.truncf %137 : vector<16x16xf32> to vector<16x16xbf16>
    %cst_68 = arith.constant dense<0.000000e+00> : vector<48x16xf32>
    %141 = tpu.matmul %2, %140, %cst_68 {dimension_numbers = #tpu.dot_dimension_numbers<[1], [0], [0], [1], [0, 0, 1, 1], [], []>} : vector<48x16xbf16>, vector<16x16xbf16>, vector<48x16xf32> -> vector<48x16xf32>
    %142 = arith.addf %139, %141 : vector<48x16xf32>
    %143 = vector.extract_strided_slice %1 {offsets = [0, 0], sizes = [16, 16], strides = [1, 1]} : vector<16x64xbf16> to vector<16x16xbf16>
    %144 = arith.truncf %142 : vector<48x16xf32> to vector<48x16xbf16>
    %145 = arith.mulf %144, %2 : vector<48x16xbf16>
    %cst_69 = arith.constant dense<0.000000e+00> : vector<16x16xf32>
    %146 = tpu.matmul %0, %145, %cst_69 {dimension_numbers = #tpu.dot_dimension_numbers<[1], [0], [0], [1], [0, 0, 1, 1], [], []>} : vector<16x48xbf16>, vector<48x16xbf16>, vector<16x16xf32> -> vector<16x16xf32>
    %147 = arith.addf %138, %146 : vector<16x16xf32>
    %cst_70 = arith.constant 2.000000e-01 : f32
    %148 = vector.broadcast %cst_70 : f32 to vector<16x16xf32>
    %149 = arith.mulf %148, %147 : vector<16x16xf32>
    %150 = arith.maximumf %147, %149 : vector<16x16xf32>
    %cst_71 = arith.constant 5.000000e-01 : bf16
    %151 = vector.broadcast %cst_71 : bf16 to vector<16x16xbf16>
    %152 = arith.cmpf ogt, %143, %151 : vector<16x16xbf16>
    %cst_72 = arith.constant -1.000000e+30 : f32
    %153 = vector.broadcast %cst_72 : f32 to vector<16x16xf32>
    %154 = arith.select %152, %150, %153 : vector<16x16xi1>, vector<16x16xf32>
    %cst_73 = arith.constant dense<0xFF800000> : vector<16xf32>
    %155 = vector.multi_reduction <maximumf>, %154, %cst_73 [1] : vector<16x16xf32> to vector<16xf32>
    %156 = vector.shape_cast %155 : vector<16xf32> to vector<16x1xf32>
    %cst_74 = arith.constant 0.000000e+00 : f32
    %157 = vector.broadcast %cst_74 : f32 to vector<16x1xf32>
    %158 = arith.maximumf %156, %157 : vector<16x1xf32>
    %159 = vector.broadcast %158 : vector<16x1xf32> to vector<16x16xf32>
    %160 = arith.subf %154, %159 : vector<16x16xf32>
    %161 = math.exp %160 : vector<16x16xf32>
    %162 = arith.truncf %161 : vector<16x16xf32> to vector<16x16xbf16>
    %cst_75 = arith.constant dense<0.000000e+00> : vector<16xf32>
    %163 = vector.multi_reduction <add>, %161, %cst_75 [1] : vector<16x16xf32> to vector<16xf32>
    %164 = vector.shape_cast %163 : vector<16xf32> to vector<16x1xf32>
    %cst_76 = arith.constant dense<0.000000e+00> : vector<16x128xf32>
    %165 = tpu.matmul %162, %134, %cst_76 {dimension_numbers = #tpu.dot_dimension_numbers<[1], [0], [0], [1], [0, 0, 1, 1], [], []>} : vector<16x16xbf16>, vector<16x128xbf16>, vector<16x128xf32> -> vector<16x128xf32>
    %cst_77 = arith.constant 0.000000e+00 : f32
    %166 = vector.broadcast %cst_77 : f32 to vector<16x1xf32>
    %167 = arith.cmpf ogt, %164, %166 : vector<16x1xf32>
    %cst_78 = arith.constant 1.000000e+00 : f32
    %168 = vector.broadcast %cst_78 : f32 to vector<16x1xf32>
    %169 = arith.select %167, %164, %168 : vector<16x1xi1>, vector<16x1xf32>
    %170 = tpu.reciprocal %169 {approx = true} : vector<16x1xf32> -> vector<16x1xf32>
    %171 = vector.broadcast %170 : vector<16x1xf32> to vector<16x128xf32>
    %172 = arith.mulf %165, %171 : vector<16x128xf32>
    %173 = arith.addf %133, %172 : vector<16x128xf32>
    %cst_79 = arith.constant 0.000000e+00 : f32
    %174 = vector.broadcast %cst_79 : f32 to vector<16x128xf32>
    %175 = arith.maximumf %173, %174 : vector<16x128xf32>
    %c0_80 = arith.constant 0 : index
    %c0_81 = arith.constant 0 : index
    %176 = vector.load %arg8[%c0_80, %c0_81] : memref<16x128xf32, #tpu.memory_space<vmem>>, vector<16x128xf32>
    tpu.vector_store %arg8[%c0_80, %c0_81], %175 {strides = array<i32>} : memref<16x128xf32, #tpu.memory_space<vmem>>, vector<16x128xf32>,
    return
  }
}

</mosaic_0001>

<llo_original>
// kernel: net_forward.1
$region0: #{net_forward.1}
  #allocation0 [shape = 'u32[]', space=smem, size = 0x4, offset = 0x4, fixed_abs, tag = 'smem constant byte address 0x4 - core index']
  #allocation1 [shape = 'u32[72,128]{1,0:T(1,128)}', space=vmem, size = 0x9000, scoped, tag = 'internal scratch']
  %s0 = inlined_call_operand.vmem [shape: f32[16,128], index: 0, kind: input, shape index: {}]
  %s1 = inlined_call_operand.vmem [shape: f32[48,1], index: 1, kind: input, shape index: {}]
  %s2 = inlined_call_operand.vmem [shape: f32[56,32], index: 2, kind: input, shape index: {}]
  %s3 = inlined_call_operand.hbm [shape: bf16[384,256], index: 3, kind: input, shape index: {}]
  %s4 = inlined_call_operand.vmem [shape: f32[24,256], index: 4, kind: input, shape index: {}]
  %s5 = inlined_call_operand.hbm [shape: bf16[384,128], index: 5, kind: input, shape index: {}]
  %s6 = inlined_call_operand.vmem [shape: bf16[32,256], index: 6, kind: input, shape index: {}]
  %s7 = inlined_call_operand.hbm [shape: bf16[256,128], index: 7, kind: input, shape index: {}]
  %s8 = inlined_call_operand.vmem [shape: f32[16,128], index: 8, kind: output, shape index: {}]
  %s9 = sld [smem:[#allocation0]]
  $region54: #{net_forward.1} parent=0
    _
  %s11 = ssub.s32 1, %s9
  %s12 = scalar_select 0, %s11, %s9
  $region1: #{net_forward.1} parent=0
    #allocation2 [shape = 'u8[196608]{0}', space=vmem, size = 0x30000, scoped, tag = 'input window, operand 3, single buffered']
    #allocation3 [shape = 's32[1]{0}', space=sflag, size = 0x4, scoped, tag = 'scoped memory for net_forward.1']
    #allocation4 [shape = 'u8[98304]{0}', space=vmem, size = 0x18000, scoped, tag = 'input window, operand 5, single buffered']
    #allocation5 [shape = 's32[1]{0}', space=sflag, size = 0x4, scoped, tag = 'scoped memory for net_forward.1']
    #allocation6 [shape = 'u8[65536]{0}', space=vmem, size = 0x10000, scoped, tag = 'input window, operand 7, single buffered']
    %13 = vsyncpa [#allocation3], 0
    %14 = vsyncpa [#allocation5], 0
    // Predicated region
    $region2: #{net_forward.1} parent=1 // pred_check
      _
    $region3: #{net_forward.1} parent=1 // pred_check_branch
      %16 = sbr.rel (0) target = $region5
    $region4: #{net_forward.1} parent=1 // pred_region
      _
    $region5: #{net_forward.1} parent=1 // pred_fallthru
      _
    // Predicated region
    $region6: #{net_forward.1} parent=1 // pred_check
      _
    $region7: #{net_forward.1} parent=1 // pred_check_branch
      %18 = sbr.rel (0) target = $region9
    $region8: #{net_forward.1} parent=1 // pred_region
      _
    $region9: #{net_forward.1} parent=1 // pred_fallthru
      _
    // Predicated region
    $region10: #{net_forward.1} parent=1 // pred_check
      _
    $region11: #{net_forward.1} parent=1 // pred_check_branch
      %20 = sbr.rel (0) target = $region13
    $region12: #{net_forward.1} parent=1 // pred_region
      _
    $region13: #{net_forward.1} parent=1 // pred_fallthru
      _
    // Predicated region
    $region14: #{net_forward.1} parent=1 // pred_check
      _
    $region15: #{net_forward.1} parent=1 // pred_check_branch
      %22 = sbr.rel (0) target = $region17
    $region16: #{net_forward.1} parent=1 // pred_region
      %24 = vsyncadd [#allocation3], 0
      %s25 = sshll.u32 %s3, 4
      %s26 = int_to_ptr.hbm [resolvable:$true] %s25
      %s27 = sshll.u32 [#allocation2], 4
      %s28 = int_to_ptr.vmem [resolvable:$true] %s27
      %33 = dma.hbm_to_vmem [thread:$0]  %s26, 6144, %s28, [#allocation3], 128, 128, 8
    $region17: #{net_forward.1} parent=1 // pred_fallthru
      _
    // Predicated region
    $region18: #{net_forward.1} parent=1 // pred_check
      _
    $region19: #{net_forward.1} parent=1 // pred_check_branch
      %35 = sbr.rel (0) target = $region21
    $region20: #{net_forward.1} parent=1 // pred_region
      _
    $region21: #{net_forward.1} parent=1 // pred_fallthru
      _
    // Predicated region
    $region22: #{net_forward.1} parent=1 // pred_check
      _
    $region23: #{net_forward.1} parent=1 // pred_check_branch
      %37 = sbr.rel (0) target = $region25
    $region24: #{net_forward.1} parent=1 // pred_region
      %39 = vsyncadd [#allocation5], 0
      %s40 = sshll.u32 %s5, 4
      %s41 = int_to_ptr.hbm [resolvable:$true] %s40
      %s42 = sshll.u32 [#allocation4], 4
      %s43 = int_to_ptr.vmem [resolvable:$true] %s42
      %48 = dma.hbm_to_vmem [thread:$0]  %s41, 3072, %s43, [#allocation5], 64, 64, 4
    $region25: #{net_forward.1} parent=1 // pred_fallthru
      _
    // Predicated region
    $region26: #{net_forward.1} parent=1 // pred_check
      _
    $region27: #{net_forward.1} parent=1 // pred_check_branch
      %50 = sbr.rel (0) target = $region29
    $region28: #{net_forward.1} parent=1 // pred_region
      _
    $region29: #{net_forward.1} parent=1 // pred_fallthru
      _
    // Predicated region
    $region30: #{net_forward.1} parent=1 // pred_check
      _
    $region31: #{net_forward.1} parent=1 // pred_check_branch
      %52 = sbr.rel (0) target = $region33
    $region32: #{net_forward.1} parent=1 // pred_region
      %54 = vsyncadd [#allocation5], 0
      %s55 = sshll.u32 %s7, 4
      %s56 = int_to_ptr.hbm [resolvable:$true] %s55
      %s57 = sshll.u32 [#allocation6], 4
      %s58 = int_to_ptr.vmem [resolvable:$true] %s57
      %63 = dma.hbm_to_vmem [thread:$0]  %s56, 2048, %s58, [#allocation5], 64, 64, 4
    $region33: #{net_forward.1} parent=1 // pred_fallthru
      _
    // Predicated region
    $region34: #{net_forward.1} parent=1 // pred_check
      _
    $region35: #{net_forward.1} parent=1 // pred_check_branch
      %65 = sbr.rel (0) target = $region37
    $region36: #{net_forward.1} parent=1 // pred_region
      %67 = dma.done [#allocation3], 6144
    $region37: #{net_forward.1} parent=1 // pred_fallthru
      _
    // Predicated region
    $region38: #{net_forward.1} parent=1 // pred_check
      _
    $region39: #{net_forward.1} parent=1 // pred_check_branch
      %69 = sbr.rel (0) target = $region41
    $region40: #{net_forward.1} parent=1 // pred_region
      %71 = dma.done [#allocation5], 3072
    $region41: #{net_forward.1} parent=1 // pred_fallthru
      _
    // Predicated region
    $region42: #{net_forward.1} parent=1 // pred_check
      _
    $region43: #{net_forward.1} parent=1 // pred_check_branch
      %73 = sbr.rel (0) target = $region45
    $region44: #{net_forward.1} parent=1 // pred_region
      %75 = dma.done [#allocation5], 2048
    $region45: #{net_forward.1} parent=1 // pred_fallthru
      _
    %v77 = vld [vmem:[#allocation6] sm:$0xf]
    %v78 = vld [vmem:[#allocation6 + $0x4] sm:$0xf]
    %v79 = vld [vmem:[#allocation6 + $0x8] sm:$0xf]
    %v80 = vld [vmem:[#allocation6 + $0xc] sm:$0xf]
    %v81 = vld [vmem:[#allocation6 + $0x10] sm:$0xf]
    %v82 = vld [vmem:[#allocation6 + $0x14] sm:$0xf]
    %v83 = vld [vmem:[#allocation6 + $0x18] sm:$0xf]
    %v84 = vld [vmem:[#allocation6 + $0x1c] sm:$0xf]
    %v85 = vld [vmem:[#allocation6 + $0x20] sm:$0xf]
    %v86 = vld [vmem:[#allocation6 + $0x24] sm:$0xf]
    %v87 = vld [vmem:[#allocation6 + $0x28] sm:$0xf]
    %v88 = vld [vmem:[#allocation6 + $0x2c] sm:$0xf]
    %v89 = vld [vmem:[#allocation6 + $0x30] sm:$0xf]
    %v90 = vld [vmem:[#allocation6 + $0x34] sm:$0xf]
    %v91 = vld [vmem:[#allocation6 + $0x38] sm:$0xf]
    %v92 = vld [vmem:[#allocation6 + $0x3c] sm:$0xf]
    %v93 = vld [vmem:[#allocation6 + $0x40] sm:$0xf]
    %v94 = vld [vmem:[#allocation6 + $0x44] sm:$0xf]
    %v95 = vld [vmem:[#allocation6 + $0x48] sm:$0xf]
    %v96 = vld [vmem:[#allocation6 + $0x4c] sm:$0xf]
    %v97 = vld [vmem:[#allocation6 + $0x50] sm:$0xf]
    %v98 = vld [vmem:[#allocation6 + $0x54] sm:$0xf]
    %v99 = vld [vmem:[#allocation6 + $0x58] sm:$0xf]
    %v100 = vld [vmem:[#allocation6 + $0x5c] sm:$0xf]
    %v101 = vld [vmem:[#allocation6 + $0x60] sm:$0xf]
    %v102 = vld [vmem:[#allocation6 + $0x64] sm:$0xf]
    %v103 = vld [vmem:[#allocation6 + $0x68] sm:$0xf]
    %v104 = vld [vmem:[#allocation6 + $0x6c] sm:$0xf]
    %v105 = vld [vmem:[#allocation6 + $0x70] sm:$0xf]
    %v106 = vld [vmem:[#allocation6 + $0x74] sm:$0xf]
    %v107 = vld [vmem:[#allocation6 + $0x78] sm:$0xf]
    %v108 = vld [vmem:[#allocation6 + $0x7c] sm:$0xf]
    %v109 = vld [vmem:[%s1] sm:$0xff]
    %v110 = vld [vmem:[%s1 + $0x8] sm:$0xff]
    %v111 = vld [vmem:[%s1 + $0x10] sm:$0xff]
    %v112 = vld [vmem:[%s1 + $0x18] sm:$0xff]
    %v113 = vld [vmem:[%s1 + $0x20] sm:$0xff]
    %v114 = vld [vmem:[%s1 + $0x28] sm:$0xff]
    %v115 = vld [vmem:[%s2] sm:$0x1]
    %117 = vset.pattern.permute.xlu0 0
    %118 = vperm.xlu0 %117, %v109
    %v119 = vpop.permute.xlu0 %118
    %122 = vset.pattern.permute.xlu0 0
    %123 = vperm.xlu0 %122, %v110
    %v124 = vpop.permute.xlu0 %123
    %127 = vset.pattern.permute.xlu0 0
    %128 = vperm.xlu0 %127, %v111
    %v129 = vpop.permute.xlu0 %128
    %132 = vset.pattern.permute.xlu0 0
    %133 = vperm.xlu0 %132, %v112
    %v134 = vpop.permute.xlu0 %133
    %137 = vset.pattern.permute.xlu0 0
    %138 = vperm.xlu0 %137, %v113
    %v139 = vpop.permute.xlu0 %138
    %142 = vset.pattern.permute.xlu0 0
    %143 = vperm.xlu0 %142, %v114
    %v144 = vpop.permute.xlu0 %143
    %v146 = vperm.slane %v115, 0
    %v147 = vmul.f32 %v119, %v146
    %v148 = vmul.f32 %v124, %v146
    %v149 = vmul.f32 %v129, %v146
    %v150 = vmul.f32 %v134, %v146
    %v151 = vmul.f32 %v139, %v146
    %v152 = vmul.f32 %v144, %v146
    %v153 = vld [vmem:[%s2 + $0x8] sm:$0x1]
    %v154 = vperm.slane %v153, 0
    %v155 = vadd.f32 %v147, %v154
    %v156 = vadd.f32 %v148, %v154
    %v157 = vadd.f32 %v149, %v154
    %v158 = vadd.f32 %v150, %v154
    %v159 = vadd.f32 %v151, %v154
    %v160 = vadd.f32 %v152, %v154
    %v161 = vand.u32 2147483647, %v155
    %vm162 = vcmp.le.f32.partialorder %v161, 0.7853982
    %vm163 = vcmp.lt.s32.totalorder %v155, 0
    %v164 = vand.u32 %v155, 2139095040
    %v165 = vshrl.u32 %v164, 23
    %v166 = vsub.s32 %v165, 127
    %v167 = vand.u32 2147483647, %v155
    %v168 = vand.u32 %v167, 8388607
    %v169 = vor.u32 %v168, 8388608
    %v170 = vsub.s32 0, %v169
    %v171 = vadd.s32 %v166, 1
    %vm172 = vcmp.gt.s32.totalorder %v171, 0
    %v173 = vsel %vm172, %v171, 0
    %v174 = vshrl.u32 %v173, 5
    %v175 = vand.u32 %v173, 31
    %v176 = vsub.s32 32, %v175
    %v177 = vshrl.u32 683565275, %v176
    %v178 = vshll.u32 683565275, %v175
    %v179 = vshrl.u32 2475754826, %v176
    %v180 = vor.u32 %v178, %v179
    %v181 = vshll.u32 2475754826, %v175
    %v182 = vshrl.u32 2131351028, %v176
    %v183 = vor.u32 %v181, %v182
    %v184 = vshll.u32 2131351028, %v175
    %v185 = vshrl.u32 2102212464, %v176
    %v186 = vor.u32 %v184, %v185
    %v187 = vshll.u32 2102212464, %v175
    %v188 = vshrl.u32 920167782, %v176
    %v189 = vor.u32 %v187, %v188
    %v190 = vshll.u32 920167782, %v175
    %v191 = vshrl.u32 1326507024, %v176
    %v192 = vor.u32 %v190, %v191
    %vm193 = vcmp.lt.s32.totalorder %v174, 1
    %vm194 = vcmp.lt.s32.totalorder %v174, 2
    %vm195 = vcmp.lt.s32.totalorder %v174, 3
    %vm196 = vcmp.lt.s32.totalorder %v174, 4
    %v197 = vsel %vm193, %v177, %v180
    %v198 = vsel %vm196, %v186, 2102212464
    %v199 = vsel %vm195, %v183, %v198
    %v200 = vsel %vm194, %v197, %v199
    %v201 = vsel %vm193, %v180, %v183
    %v202 = vsel %vm196, %v189, 920167782
    %v203 = vsel %vm195, %v186, %v202
    %v204 = vsel %vm194, %v201, %v203
    %v205 = vsel %vm193, %v183, %v186
    %v206 = vsel %vm196, %v192, 1326507024
    %v207 = vsel %vm195, %v189, %v206
    %v208 = vsel %vm194, %v205, %v207
    %v209 = vshll.u32 %v169, 8
    %v210 = vand.u32 %v209, 65535
    %v211 = vshrl.u32 %v209, 16
    %v212 = vand.u32 %v208, 65535
    %v213 = vshrl.u32 %v208, 16
    %v214 = vmul.u32 %v210, %v212
    %v215 = vmul.u32 %v210, %v213
    %v216 = vmul.u32 %v211, %v212
    %v217 = vmul.u32 %v211, %v213
    %v218 = vshll.u32 %v215, 16
    %v219 = vshrl.u32 %v215, 16
    %v220 = vshll.u32 %v216, 16
    %v221 = vshrl.u32 %v216, 16
    %vm222 = vc.u32 %v214, %v218
    %v223 = vsel %vm222, 1, 0
    %v224 = vadd.s32 %v214, %v218
    %v225 = vadd.s32 %v217, %v223
    %vm226 = vc.u32 %v224, %v220
    %v227 = vsel %vm226, 1, 0
    %v228 = vadd.s32 %v224, %v220
    %v229 = vadd.s32 %v225, %v227
    %v230 = vadd.s32 %v229, %v219
    %v231 = vadd.s32 %v230, %v221
    %v232 = vand.u32 %v209, 65535
    %v233 = vshrl.u32 %v209, 16
    %v234 = vand.u32 %v204, 65535
    %v235 = vshrl.u32 %v204, 16
    %v236 = vmul.u32 %v232, %v234
    %v237 = vmul.u32 %v232, %v235
    %v238 = vmul.u32 %v233, %v234
    %v239 = vmul.u32 %v233, %v235
    %v240 = vshll.u32 %v237, 16
    %v241 = vshrl.u32 %v237, 16
    %v242 = vshll.u32 %v238, 16
    %v243 = vshrl.u32 %v238, 16
    %vm244 = vc.u32 %v236, %v240
    %v245 = vsel %vm244, 1, 0
    %v246 = vadd.s32 %v236, %v240
    %v247 = vadd.s32 %v239, %v245
    %vm248 = vc.u32 %v246, %v242
    %v249 = vsel %vm248, 1, 0
    %v250 = vadd.s32 %v246, %v242
    %v251 = vadd.s32 %v247, %v249
    %v252 = vadd.s32 %v251, %v241
    %v253 = vadd.s32 %v252, %v243
    %v254 = vmul.u32 %v209, %v200
    %v255 = vadd.s32 %v231, %v250
    %vm256 = vc.u32 %v231, %v250
    %v257 = vadd.s32 %v253, 1
    %v258 = vsel %vm256, %v257, %v253
    %v259 = vadd.s32 %v254, %v258
    %v260 = vadd.s32 %v259, 536870912
    %v261 = vshrl.u32 %v260, 30
    %v262 = vshll.u32 %v261, 30
    %v263 = vsub.s32 %v259, %v262
    %vm264 = vcmp.lt.s32.totalorder %v263, 0
    %v265 = vsub.s32 0, %v263
    %v266 = vsel %vm264, %v265, %v263
    %v267 = vclz %v266
    %v268 = vsub.s32 %v267, 2
    %vm269 = vcmp.gt.s32.totalorder 0, %v268
    %v270 = vsel %vm269, 0, %v268
    %v271 = vsub.s32 32, %v270
    %v272 = vshll.u32 %v263, %v270
    %v273 = vshrl.u32 %v255, %v271
    %v274 = vor.u32 %v272, %v273
    %v275 = vsub.s32 4294967266, %v270
    %v276 = vadd.s32 %v275, 127
    %v277 = vshll.u32 %v276, 23
    %v278 = vor.u32 4788187, %v277
    %v279 = vand.u32 2147483647, %v278
    %v281 = vcvt.s32.f32 %v274
    %v282 = vmul.f32 %v281, %v279
    %v283 = vxor.u32 %v282, 2147483648
    %v284 = vsel %vm163, %v283, %v282
    %v285 = vsub.s32 4, %v261
    %v286 = vsel %vm163, %v285, %v261
    %v287 = vsel %vm162, %v155, %v284
    %v288 = vsel %vm162, 0, %v286
    %v289 = vmul.f32 %v287, %v287
    %v290 = vmul.f32 %v289, -0.001358992
    %v291 = vadd.f32 %v290, 0.041655596
    %v292 = vmul.f32 %v289, %v291
    %v293 = vadd.f32 %v292, -0.4999988
    %v294 = vmul.f32 %v289, %v293
    %v295 = vadd.f32 1.0, %v294
    %v296 = vmul.f32 %v287, %v287
    %v297 = vmul.f32 %v296, -0.00019511016
    %v298 = vadd.f32 %v297, 0.008332121
    %v299 = vmul.f32 %v296, %v298
    %v300 = vadd.f32 %v299, -0.16666654
    %v301 = vmul.f32 %v296, %v300
    %v302 = vadd.f32 %v301, 1.0
    %v303 = vmul.f32 %v302, %v287
    %vm304 = vweird.f32 %v155
    %v305 = vand.u32 %v288, 3
    %vm306 = vcmp.lt.s32.totalorder %v305, 2
    %vm307 = vcmp.eq.s32.totalorder %v305, 0
    %v308 = vxor.u32 %v303, 2147483648
    %v309 = vsel %vm307, %v295, %v308
    %vm310 = vcmp.eq.s32.totalorder %v305, 2
    %v311 = vxor.u32 %v295, 2147483648
    %v312 = vsel %vm310, %v311, %v303
    %v313 = vsel %vm306, %v309, %v312
    %v314 = vsel %vm304, nan, %v313
    %v315 = vand.u32 2147483647, %v156
    %vm316 = vcmp.le.f32.partialorder %v315, 0.7853982
    %vm317 = vcmp.lt.s32.totalorder %v156, 0
    %v318 = vand.u32 %v156, 2139095040
    %v319 = vshrl.u32 %v318, 23
    %v320 = vsub.s32 %v319, 127
    %v321 = vand.u32 2147483647, %v156
    %v322 = vand.u32 %v321, 8388607
    %v323 = vor.u32 %v322, 8388608
    %v324 = vsub.s32 0, %v323
    %v325 = vadd.s32 %v320, 1
    %vm326 = vcmp.gt.s32.totalorder %v325, 0
    %v327 = vsel %vm326, %v325, 0
    %v328 = vshrl.u32 %v327, 5
    %v329 = vand.u32 %v327, 31
    %v330 = vsub.s32 32, %v329
    %v331 = vshrl.u32 683565275, %v330
    %v332 = vshll.u32 683565275, %v329
    %v333 = vshrl.u32 2475754826, %v330
    %v334 = vor.u32 %v332, %v333
    %v335 = vshll.u32 2475754826, %v329
    %v336 = vshrl.u32 2131351028, %v330
    %v337 = vor.u32 %v335, %v336
    %v338 = vshll.u32 2131351028, %v329
    %v339 = vshrl.u32 2102212464, %v330
    %v340 = vor.u32 %v338, %v339
    %v341 = vshll.u32 2102212464, %v329
    %v342 = vshrl.u32 920167782, %v330
    %v343 = vor.u32 %v341, %v342
    %v344 = vshll.u32 920167782, %v329
    %v345 = vshrl.u32 1326507024, %v330
    %v346 = vor.u32 %v344, %v345
    %vm347 = vcmp.lt.s32.totalorder %v328, 1
    %vm348 = vcmp.lt.s32.totalorder %v328, 2
    %vm349 = vcmp.lt.s32.totalorder %v328, 3
    %vm350 = vcmp.lt.s32.totalorder %v328, 4
    %v351 = vsel %vm347, %v331, %v334
    %v352 = vsel %vm350, %v340, 2102212464
    %v353 = vsel %vm349, %v337, %v352
    %v354 = vsel %vm348, %v351, %v353
    %v355 = vsel %vm347, %v334, %v337
    %v356 = vsel %vm350, %v343, 920167782
    %v357 = vsel %vm349, %v340, %v356
    %v358 = vsel %vm348, %v355, %v357
    %v359 = vsel %vm347, %v337, %v340
    %v360 = vsel %vm350, %v346, 1326507024
    %v361 = vsel %vm349, %v343, %v360
    %v362 = vsel %vm348, %v359, %v361
    %v363 = vshll.u32 %v323, 8
    %v364 = vand.u32 %v363, 65535
    %v365 = vshrl.u32 %v363, 16
    %v366 = vand.u32 %v362, 65535
    %v367 = vshrl.u32 %v362, 16
    %v368 = vmul.u32 %v364, %v366
    %v369 = vmul.u32 %v364, %v367
    %v370 = vmul.u32 %v365, %v366
    %v371 = vmul.u32 %v365, %v367
    %v372 = vshll.u32 %v369, 16
    %v373 = vshrl.u32 %v369, 16
    %v374 = vshll.u32 %v370, 16
    %v375 = vshrl.u32 %v370, 16
    %vm376 = vc.u32 %v368, %v372
    %v377 = vsel %vm376, 1, 0
    %v378 = vadd.s32 %v368, %v372
    %v379 = vadd.s32 %v371, %v377
    %vm380 = vc.u32 %v378, %v374
    %v381 = vsel %vm380, 1, 0
    %v382 = vadd.s32 %v378, %v374
    %v383 = vadd.s32 %v379, %v381
    %v384 = vadd.s32 %v383, %v373
    %v385 = vadd.s32 %v384, %v375
    %v386 = vand.u32 %v363, 65535
    %v387 = vshrl.u32 %v363, 16
    %v388 = vand.u32 %v358, 65535
    %v389 = vshrl.u32 %v358, 16
    %v390 = vmul.u32 %v386, %v388
    %v391 = vmul.u32 %v386, %v389
    %v392 = vmul.u32 %v387, %v388
    %v393 = vmul.u32 %v387, %v389
    %v394 = vshll.u32 %v391, 16
    %v395 = vshrl.u32 %v391, 16
    %v396 = vshll.u32 %v392, 16
    %v397 = vshrl.u32 %v392, 16
    %vm398 = vc.u32 %v390, %v394
    %v399 = vsel %vm398, 1, 0
    %v400 = vadd.s32 %v390, %v394
    %v401 = vadd.s32 %v393, %v399
    %vm402 = vc.u32 %v400, %v396
    %v403 = vsel %vm402, 1, 0
    %v404 = vadd.s32 %v400, %v396
    %v405 = vadd.s32 %v401, %v403
    %v406 = vadd.s32 %v405, %v395
    %v407 = vadd.s32 %v406, %v397
    %v408 = vmul.u32 %v363, %v354
    %v409 = vadd.s32 %v385, %v404
    %vm410 = vc.u32 %v385, %v404
    %v411 = vadd.s32 %v407, 1
    %v412 = vsel %vm410, %v411, %v407
    %v413 = vadd.s32 %v408, %v412
    %v414 = vadd.s32 %v413, 536870912
    %v415 = vshrl.u32 %v414, 30
    %v416 = vshll.u32 %v415, 30
    %v417 = vsub.s32 %v413, %v416
    %vm418 = vcmp.lt.s32.totalorder %v417, 0
    %v419 = vsub.s32 0, %v417
    %v420 = vsel %vm418, %v419, %v417
    %v421 = vclz %v420
    %v422 = vsub.s32 %v421, 2
    %vm423 = vcmp.gt.s32.totalorder 0, %v422
    %v424 = vsel %vm423, 0, %v422
    %v425 = vsub.s32 32, %v424
    %v426 = vshll.u32 %v417, %v424
    %v427 = vshrl.u32 %v409, %v425
    %v428 = vor.u32 %v426, %v427
    %v429 = vsub.s32 4294967266, %v424
    %v430 = vadd.s32 %v429, 127
    %v431 = vshll.u32 %v430, 23
    %v432 = vor.u32 4788187, %v431
    %v433 = vand.u32 2147483647, %v432
    %v435 = vcvt.s32.f32 %v428
    %v436 = vmul.f32 %v435, %v433
    %v437 = vxor.u32 %v436, 2147483648
    %v438 = vsel %vm317, %v437, %v436
    %v439 = vsub.s32 4, %v415
    %v440 = vsel %vm317, %v439, %v415
    %v441 = vsel %vm316, %v156, %v438
    %v442 = vsel %vm316, 0, %v440
    %v443 = vmul.f32 %v441, %v441
    %v444 = vmul.f32 %v443, -0.001358992
    %v445 = vadd.f32 %v444, 0.041655596
    %v446 = vmul.f32 %v443, %v445
    %v447 = vadd.f32 %v446, -0.4999988
    %v448 = vmul.f32 %v443, %v447
    %v449 = vadd.f32 1.0, %v448
    %v450 = vmul.f32 %v441, %v441
    %v451 = vmul.f32 %v450, -0.00019511016
    %v452 = vadd.f32 %v451, 0.008332121
    %v453 = vmul.f32 %v450, %v452
    %v454 = vadd.f32 %v453, -0.16666654
    %v455 = vmul.f32 %v450, %v454
    %v456 = vadd.f32 %v455, 1.0
    %v457 = vmul.f32 %v456, %v441
    %vm458 = vweird.f32 %v156
    %v459 = vand.u32 %v442, 3
    %vm460 = vcmp.lt.s32.totalorder %v459, 2
    %vm461 = vcmp.eq.s32.totalorder %v459, 0
    %v462 = vxor.u32 %v457, 2147483648
    %v463 = vsel %vm461, %v449, %v462
    %vm464 = vcmp.eq.s32.totalorder %v459, 2
    %v465 = vxor.u32 %v449, 2147483648
    %v466 = vsel %vm464, %v465, %v457
    %v467 = vsel %vm460, %v463, %v466
    %v468 = vsel %vm458, nan, %v467
    %v469 = vand.u32 2147483647, %v157
    %vm470 = vcmp.le.f32.partialorder %v469, 0.7853982
    %vm471 = vcmp.lt.s32.totalorder %v157, 0
    %v472 = vand.u32 %v157, 2139095040
    %v473 = vshrl.u32 %v472, 23
    %v474 = vsub.s32 %v473, 127
    %v475 = vand.u32 2147483647, %v157
    %v476 = vand.u32 %v475, 8388607
    %v477 = vor.u32 %v476, 8388608
    %v478 = vsub.s32 0, %v477
    %v479 = vadd.s32 %v474, 1
    %vm480 = vcmp.gt.s32.totalorder %v479, 0
    %v481 = vsel %vm480, %v479, 0
    %v482 = vshrl.u32 %v481, 5
    %v483 = vand.u32 %v481, 31
    %v484 = vsub.s32 32, %v483
    %v485 = vshrl.u32 683565275, %v484
    %v486 = vshll.u32 683565275, %v483
    %v487 = vshrl.u32 2475754826, %v484
    %v488 = vor.u32 %v486, %v487
    %v489 = vshll.u32 2475754826, %v483
    %v490 = vshrl.u32 2131351028, %v484
    %v491 = vor.u32 %v489, %v490
    %v492 = vshll.u32 2131351028, %v483
    %v493 = vshrl.u32 2102212464, %v484
    %v494 = vor.u32 %v492, %v493
    %v495 = vshll.u32 2102212464, %v483
    %v496 = vshrl.u32 920167782, %v484
    %v497 = vor.u32 %v495, %v496
    %v498 = vshll.u32 920167782, %v483
    %v499 = vshrl.u32 1326507024, %v484
    %v500 = vor.u32 %v498, %v499
    %vm501 = vcmp.lt.s32.totalorder %v482, 1
    %vm502 = vcmp.lt.s32.totalorder %v482, 2
    %vm503 = vcmp.lt.s32.totalorder %v482, 3
    %vm504 = vcmp.lt.s32.totalorder %v482, 4
    %v505 = vsel %vm501, %v485, %v488
    %v506 = vsel %vm504, %v494, 2102212464
    %v507 = vsel %vm503, %v491, %v506
    %v508 = vsel %vm502, %v505, %v507
    %v509 = vsel %vm501, %v488, %v491
    %v510 = vsel %vm504, %v497, 920167782
    %v511 = vsel %vm503, %v494, %v510
    %v512 = vsel %vm502, %v509, %v511
    %v513 = vsel %vm501, %v491, %v494
    %v514 = vsel %vm504, %v500, 1326507024
    %v515 = vsel %vm503, %v497, %v514
    %v516 = vsel %vm502, %v513, %v515
    %v517 = vshll.u32 %v477, 8
    %v518 = vand.u32 %v517, 65535
    %v519 = vshrl.u32 %v517, 16
    %v520 = vand.u32 %v516, 65535
    %v521 = vshrl.u32 %v516, 16
    %v522 = vmul.u32 %v518, %v520
    %v523 = vmul.u32 %v518, %v521
    %v524 = vmul.u32 %v519, %v520
    %v525 = vmul.u32 %v519, %v521
    %v526 = vshll.u32 %v523, 16
    %v527 = vshrl.u32 %v523, 16
    %v528 = vshll.u32 %v524, 16
    %v529 = vshrl.u32 %v524, 16
    %vm530 = vc.u32 %v522, %v526
    %v531 = vsel %vm530, 1, 0
    %v532 = vadd.s32 %v522, %v526
    %v533 = vadd.s32 %v525, %v531
    %vm534 = vc.u32 %v532, %v528
    %v535 = vsel %vm534, 1, 0
    %v536 = vadd.s32 %v532, %v528
    %v537 = vadd.s32 %v533, %v535
    %v538 = vadd.s32 %v537, %v527
    %v539 = vadd.s32 %v538, %v529
    %v540 = vand.u32 %v517, 65535
    %v541 = vshrl.u32 %v517, 16
    %v542 = vand.u32 %v512, 65535
    %v543 = vshrl.u32 %v512, 16
    %v544 = vmul.u32 %v540, %v542
    %v545 = vmul.u32 %v540, %v543
    %v546 = vmul.u32 %v541, %v542
    %v547 = vmul.u32 %v541, %v543
    %v548 = vshll.u32 %v545, 16
    %v549 = vshrl.u32 %v545, 16
    %v550 = vshll.u32 %v546, 16
    %v551 = vshrl.u32 %v546, 16
    %vm552 = vc.u32 %v544, %v548
    %v553 = vsel %vm552, 1, 0
    %v554 = vadd.s32 %v544, %v548
    %v555 = vadd.s32 %v547, %v553
    %vm556 = vc.u32 %v554, %v550
    %v557 = vsel %vm556, 1, 0
    %v558 = vadd.s32 %v554, %v550
    %v559 = vadd.s32 %v555, %v557
    %v560 = vadd.s32 %v559, %v549
    %v561 = vadd.s32 %v560, %v551
    %v562 = vmul.u32 %v517, %v508
    %v563 = vadd.s32 %v539, %v558
    %vm564 = vc.u32 %v539, %v558
    %v565 = vadd.s32 %v561, 1
    %v566 = vsel %vm564, %v565, %v561
    %v567 = vadd.s32 %v562, %v566
    %v568 = vadd.s32 %v567, 536870912
    %v569 = vshrl.u32 %v568, 30
    %v570 = vshll.u32 %v569, 30
    %v571 = vsub.s32 %v567, %v570
    %vm572 = vcmp.lt.s32.totalorder %v571, 0
    %v573 = vsub.s32 0, %v571
    %v574 = vsel %vm572, %v573, %v571
    %v575 = vclz %v574
    %v576 = vsub.s32 %v575, 2
    %vm577 = vcmp.gt.s32.totalorder 0, %v576
    %v578 = vsel %vm577, 0, %v576
    %v579 = vsub.s32 32, %v578
    %v580 = vshll.u32 %v571, %v578
    %v581 = vshrl.u32 %v563, %v579
    %v582 = vor.u32 %v580, %v581
    %v583 = vsub.s32 4294967266, %v578
    %v584 = vadd.s32 %v583, 127
    %v585 = vshll.u32 %v584, 23
    %v586 = vor.u32 4788187, %v585
    %v587 = vand.u32 2147483647, %v586
    %v589 = vcvt.s32.f32 %v582
    %v590 = vmul.f32 %v589, %v587
    %v591 = vxor.u32 %v590, 2147483648
    %v592 = vsel %vm471, %v591, %v590
    %v593 = vsub.s32 4, %v569
    %v594 = vsel %vm471, %v593, %v569
    %v595 = vsel %vm470, %v157, %v592
    %v596 = vsel %vm470, 0, %v594
    %v597 = vmul.f32 %v595, %v595
    %v598 = vmul.f32 %v597, -0.001358992
    %v599 = vadd.f32 %v598, 0.041655596
    %v600 = vmul.f32 %v597, %v599
    %v601 = vadd.f32 %v600, -0.4999988
    %v602 = vmul.f32 %v597, %v601
    %v603 = vadd.f32 1.0, %v602
    %v604 = vmul.f32 %v595, %v595
    %v605 = vmul.f32 %v604, -0.00019511016
    %v606 = vadd.f32 %v605, 0.008332121
    %v607 = vmul.f32 %v604, %v606
    %v608 = vadd.f32 %v607, -0.16666654
    %v609 = vmul.f32 %v604, %v608
    %v610 = vadd.f32 %v609, 1.0
    %v611 = vmul.f32 %v610, %v595
    %vm612 = vweird.f32 %v157
    %v613 = vand.u32 %v596, 3
    %vm614 = vcmp.lt.s32.totalorder %v613, 2
    %vm615 = vcmp.eq.s32.totalorder %v613, 0
    %v616 = vxor.u32 %v611, 2147483648
    %v617 = vsel %vm615, %v603, %v616
    %vm618 = vcmp.eq.s32.totalorder %v613, 2
    %v619 = vxor.u32 %v603, 2147483648
    %v620 = vsel %vm618, %v619, %v611
    %v621 = vsel %vm614, %v617, %v620
    %v622 = vsel %vm612, nan, %v621
    %v623 = vand.u32 2147483647, %v158
    %vm624 = vcmp.le.f32.partialorder %v623, 0.7853982
    %vm625 = vcmp.lt.s32.totalorder %v158, 0
    %v626 = vand.u32 %v158, 2139095040
    %v627 = vshrl.u32 %v626, 23
    %v628 = vsub.s32 %v627, 127
    %v629 = vand.u32 2147483647, %v158
    %v630 = vand.u32 %v629, 8388607
    %v631 = vor.u32 %v630, 8388608
    %v632 = vsub.s32 0, %v631
    %v633 = vadd.s32 %v628, 1
    %vm634 = vcmp.gt.s32.totalorder %v633, 0
    %v635 = vsel %vm634, %v633, 0
    %v636 = vshrl.u32 %v635, 5
    %v637 = vand.u32 %v635, 31
    %v638 = vsub.s32 32, %v637
    %v639 = vshrl.u32 683565275, %v638
    %v640 = vshll.u32 683565275, %v637
    %v641 = vshrl.u32 2475754826, %v638
    %v642 = vor.u32 %v640, %v641
    %v643 = vshll.u32 2475754826, %v637
    %v644 = vshrl.u32 2131351028, %v638
    %v645 = vor.u32 %v643, %v644
    %v646 = vshll.u32 2131351028, %v637
    %v647 = vshrl.u32 2102212464, %v638
    %v648 = vor.u32 %v646, %v647
    %v649 = vshll.u32 2102212464, %v637
    %v650 = vshrl.u32 920167782, %v638
    %v651 = vor.u32 %v649, %v650
    %v652 = vshll.u32 920167782, %v637
    %v653 = vshrl.u32 1326507024, %v638
    %v654 = vor.u32 %v652, %v653
    %vm655 = vcmp.lt.s32.totalorder %v636, 1
    %vm656 = vcmp.lt.s32.totalorder %v636, 2
    %vm657 = vcmp.lt.s32.totalorder %v636, 3
    %vm658 = vcmp.lt.s32.totalorder %v636, 4
    %v659 = vsel %vm655, %v639, %v642
    %v660 = vsel %vm658, %v648, 2102212464
    %v661 = vsel %vm657, %v645, %v660
    %v662 = vsel %vm656, %v659, %v661
    %v663 = vsel %vm655, %v642, %v645
    %v664 = vsel %vm658, %v651, 920167782
    %v665 = vsel %vm657, %v648, %v664
    %v666 = vsel %vm656, %v663, %v665
    %v667 = vsel %vm655, %v645, %v648
    %v668 = vsel %vm658, %v654, 1326507024
    %v669 = vsel %vm657, %v651, %v668
    %v670 = vsel %vm656, %v667, %v669
    %v671 = vshll.u32 %v631, 8
    %v672 = vand.u32 %v671, 65535
    %v673 = vshrl.u32 %v671, 16
    %v674 = vand.u32 %v670, 65535
    %v675 = vshrl.u32 %v670, 16
    %v676 = vmul.u32 %v672, %v674
    %v677 = vmul.u32 %v672, %v675
    %v678 = vmul.u32 %v673, %v674
    %v679 = vmul.u32 %v673, %v675
    %v680 = vshll.u32 %v677, 16
    %v681 = vshrl.u32 %v677, 16
    %v682 = vshll.u32 %v678, 16
    %v683 = vshrl.u32 %v678, 16
    %vm684 = vc.u32 %v676, %v680
    %v685 = vsel %vm684, 1, 0
    %v686 = vadd.s32 %v676, %v680
    %v687 = vadd.s32 %v679, %v685
    %vm688 = vc.u32 %v686, %v682
    %v689 = vsel %vm688, 1, 0
    %v690 = vadd.s32 %v686, %v682
    %v691 = vadd.s32 %v687, %v689
    %v692 = vadd.s32 %v691, %v681
    %v693 = vadd.s32 %v692, %v683
    %v694 = vand.u32 %v671, 65535
    %v695 = vshrl.u32 %v671, 16
    %v696 = vand.u32 %v666, 65535
    %v697 = vshrl.u32 %v666, 16
    %v698 = vmul.u32 %v694, %v696
    %v699 = vmul.u32 %v694, %v697
    %v700 = vmul.u32 %v695, %v696
    %v701 = vmul.u32 %v695, %v697
    %v702 = vshll.u32 %v699, 16
    %v703 = vshrl.u32 %v699, 16
    %v704 = vshll.u32 %v700, 16
    %v705 = vshrl.u32 %v700, 16
    %vm706 = vc.u32 %v698, %v702
    %v707 = vsel %vm706, 1, 0
    %v708 = vadd.s32 %v698, %v702
    %v709 = vadd.s32 %v701, %v707
    %vm710 = vc.u32 %v708, %v704
    %v711 = vsel %vm710, 1, 0
    %v712 = vadd.s32 %v708, %v704
    %v713 = vadd.s32 %v709, %v711
    %v714 = vadd.s32 %v713, %v703
    %v715 = vadd.s32 %v714, %v705
    %v716 = vmul.u32 %v671, %v662
    %v717 = vadd.s32 %v693, %v712
    %vm718 = vc.u32 %v693, %v712
    %v719 = vadd.s32 %v715, 1
    %v720 = vsel %vm718, %v719, %v715
    %v721 = vadd.s32 %v716, %v720
    %v722 = vadd.s32 %v721, 536870912
    %v723 = vshrl.u32 %v722, 30
    %v724 = vshll.u32 %v723, 30
    %v725 = vsub.s32 %v721, %v724
    %vm726 = vcmp.lt.s32.totalorder %v725, 0
    %v727 = vsub.s32 0, %v725
    %v728 = vsel %vm726, %v727, %v725
    %v729 = vclz %v728
    %v730 = vsub.s32 %v729, 2
    %vm731 = vcmp.gt.s32.totalorder 0, %v730
    %v732 = vsel %vm731, 0, %v730
    %v733 = vsub.s32 32, %v732
    %v734 = vshll.u32 %v725, %v732
    %v735 = vshrl.u32 %v717, %v733
    %v736 = vor.u32 %v734, %v735
    %v737 = vsub.s32 4294967266, %v732
    %v738 = vadd.s32 %v737, 127
    %v739 = vshll.u32 %v738, 23
    %v740 = vor.u32 4788187, %v739
    %v741 = vand.u32 2147483647, %v740
    %v743 = vcvt.s32.f32 %v736
    %v744 = vmul.f32 %v743, %v741
    %v745 = vxor.u32 %v744, 2147483648
    %v746 = vsel %vm625, %v745, %v744
    %v747 = vsub.s32 4, %v723
    %v748 = vsel %vm625, %v747, %v723
    %v749 = vsel %vm624, %v158, %v746
    %v750 = vsel %vm624, 0, %v748
    %v751 = vmul.f32 %v749, %v749
    %v752 = vmul.f32 %v751, -0.001358992
    %v753 = vadd.f32 %v752, 0.041655596
    %v754 = vmul.f32 %v751, %v753
    %v755 = vadd.f32 %v754, -0.4999988
    %v756 = vmul.f32 %v751, %v755
    %v757 = vadd.f32 1.0, %v756
    %v758 = vmul.f32 %v749, %v749
    %v759 = vmul.f32 %v758, -0.00019511016
    %v760 = vadd.f32 %v759, 0.008332121
    %v761 = vmul.f32 %v758, %v760
    %v762 = vadd.f32 %v761, -0.16666654
    %v763 = vmul.f32 %v758, %v762
    %v764 = vadd.f32 %v763, 1.0
    %v765 = vmul.f32 %v764, %v749
    %vm766 = vweird.f32 %v158
    %v767 = vand.u32 %v750, 3
    %vm768 = vcmp.lt.s32.totalorder %v767, 2
    %vm769 = vcmp.eq.s32.totalorder %v767, 0
    %v770 = vxor.u32 %v765, 2147483648
    %v771 = vsel %vm769, %v757, %v770
    %vm772 = vcmp.eq.s32.totalorder %v767, 2
    %v773 = vxor.u32 %v757, 2147483648
    %v774 = vsel %vm772, %v773, %v765
    %v775 = vsel %vm768, %v771, %v774
    %v776 = vsel %vm766, nan, %v775
    %v777 = vand.u32 2147483647, %v159
    %vm778 = vcmp.le.f32.partialorder %v777, 0.7853982
    %vm779 = vcmp.lt.s32.totalorder %v159, 0
    %v780 = vand.u32 %v159, 2139095040
    %v781 = vshrl.u32 %v780, 23
    %v782 = vsub.s32 %v781, 127
    %v783 = vand.u32 2147483647, %v159
    %v784 = vand.u32 %v783, 8388607
    %v785 = vor.u32 %v784, 8388608
    %v786 = vsub.s32 0, %v785
    %v787 = vadd.s32 %v782, 1
    %vm788 = vcmp.gt.s32.totalorder %v787, 0
    %v789 = vsel %vm788, %v787, 0
    %v790 = vshrl.u32 %v789, 5
    %v791 = vand.u32 %v789, 31
    %v792 = vsub.s32 32, %v791
    %v793 = vshrl.u32 683565275, %v792
    %v794 = vshll.u32 683565275, %v791
    %v795 = vshrl.u32 2475754826, %v792
    %v796 = vor.u32 %v794, %v795
    %v797 = vshll.u32 2475754826, %v791
    %v798 = vshrl.u32 2131351028, %v792
    %v799 = vor.u32 %v797, %v798
    %v800 = vshll.u32 2131351028, %v791
    %v801 = vshrl.u32 2102212464, %v792
    %v802 = vor.u32 %v800, %v801
    %v803 = vshll.u32 2102212464, %v791
    %v804 = vshrl.u32 920167782, %v792
    %v805 = vor.u32 %v803, %v804
    %v806 = vshll.u32 920167782, %v791
    %v807 = vshrl.u32 1326507024, %v792
    %v808 = vor.u32 %v806, %v807
    %vm809 = vcmp.lt.s32.totalorder %v790, 1
    %vm810 = vcmp.lt.s32.totalorder %v790, 2
    %vm811 = vcmp.lt.s32.totalorder %v790, 3
    %vm812 = vcmp.lt.s32.totalorder %v790, 4
    %v813 = vsel %vm809, %v793, %v796
    %v814 = vsel %vm812, %v802, 2102212464
    %v815 = vsel %vm811, %v799, %v814
    %v816 = vsel %vm810, %v813, %v815
    %v817 = vsel %vm809, %v796, %v799
    %v818 = vsel %vm812, %v805, 920167782
    %v819 = vsel %vm811, %v802, %v818
    %v820 = vsel %vm810, %v817, %v819
    %v821 = vsel %vm809, %v799, %v802
    %v822 = vsel %vm812, %v808, 1326507024
    %v823 = vsel %vm811, %v805, %v822
    %v824 = vsel %vm810, %v821, %v823
    %v825 = vshll.u32 %v785, 8
    %v826 = vand.u32 %v825, 65535
    %v827 = vshrl.u32 %v825, 16
    %v828 = vand.u32 %v824, 65535
    %v829 = vshrl.u32 %v824, 16
    %v830 = vmul.u32 %v826, %v828
    %v831 = vmul.u32 %v826, %v829
    %v832 = vmul.u32 %v827, %v828
    %v833 = vmul.u32 %v827, %v829
    %v834 = vshll.u32 %v831, 16
    %v835 = vshrl.u32 %v831, 16
    %v836 = vshll.u32 %v832, 16
    %v837 = vshrl.u32 %v832, 16
    %vm838 = vc.u32 %v830, %v834
    %v839 = vsel %vm838, 1, 0
    %v840 = vadd.s32 %v830, %v834
    %v841 = vadd.s32 %v833, %v839
    %vm842 = vc.u32 %v840, %v836
    %v843 = vsel %vm842, 1, 0
    %v844 = vadd.s32 %v840, %v836
    %v845 = vadd.s32 %v841, %v843
    %v846 = vadd.s32 %v845, %v835
    %v847 = vadd.s32 %v846, %v837
    %v848 = vand.u32 %v825, 65535
    %v849 = vshrl.u32 %v825, 16
    %v850 = vand.u32 %v820, 65535
    %v851 = vshrl.u32 %v820, 16
    %v852 = vmul.u32 %v848, %v850
    %v853 = vmul.u32 %v848, %v851
    %v854 = vmul.u32 %v849, %v850
    %v855 = vmul.u32 %v849, %v851
    %v856 = vshll.u32 %v853, 16
    %v857 = vshrl.u32 %v853, 16
    %v858 = vshll.u32 %v854, 16
    %v859 = vshrl.u32 %v854, 16
    %vm860 = vc.u32 %v852, %v856
    %v861 = vsel %vm860, 1, 0
    %v862 = vadd.s32 %v852, %v856
    %v863 = vadd.s32 %v855, %v861
    %vm864 = vc.u32 %v862, %v858
    %v865 = vsel %vm864, 1, 0
    %v866 = vadd.s32 %v862, %v858
    %v867 = vadd.s32 %v863, %v865
    %v868 = vadd.s32 %v867, %v857
    %v869 = vadd.s32 %v868, %v859
    %v870 = vmul.u32 %v825, %v816
    %v871 = vadd.s32 %v847, %v866
    %vm872 = vc.u32 %v847, %v866
    %v873 = vadd.s32 %v869, 1
    %v874 = vsel %vm872, %v873, %v869
    %v875 = vadd.s32 %v870, %v874
    %v876 = vadd.s32 %v875, 536870912
    %v877 = vshrl.u32 %v876, 30
    %v878 = vshll.u32 %v877, 30
    %v879 = vsub.s32 %v875, %v878
    %vm880 = vcmp.lt.s32.totalorder %v879, 0
    %v881 = vsub.s32 0, %v879
    %v882 = vsel %vm880, %v881, %v879
    %v883 = vclz %v882
    %v884 = vsub.s32 %v883, 2
    %vm885 = vcmp.gt.s32.totalorder 0, %v884
    %v886 = vsel %vm885, 0, %v884
    %v887 = vsub.s32 32, %v886
    %v888 = vshll.u32 %v879, %v886
    %v889 = vshrl.u32 %v871, %v887
    %v890 = vor.u32 %v888, %v889
    %v891 = vsub.s32 4294967266, %v886
    %v892 = vadd.s32 %v891, 127
    %v893 = vshll.u32 %v892, 23
    %v894 = vor.u32 4788187, %v893
    %v895 = vand.u32 2147483647, %v894
    %v897 = vcvt.s32.f32 %v890
    %v898 = vmul.f32 %v897, %v895
    %v899 = vxor.u32 %v898, 2147483648
    %v900 = vsel %vm779, %v899, %v898
    %v901 = vsub.s32 4, %v877
    %v902 = vsel %vm779, %v901, %v877
    %v903 = vsel %vm778, %v159, %v900
    %v904 = vsel %vm778, 0, %v902
    %v905 = vmul.f32 %v903, %v903
    %v906 = vmul.f32 %v905, -0.001358992
    %v907 = vadd.f32 %v906, 0.041655596
    %v908 = vmul.f32 %v905, %v907
    %v909 = vadd.f32 %v908, -0.4999988
    %v910 = vmul.f32 %v905, %v909
    %v911 = vadd.f32 1.0, %v910
    %v912 = vmul.f32 %v903, %v903
    %v913 = vmul.f32 %v912, -0.00019511016
    %v914 = vadd.f32 %v913, 0.008332121
    %v915 = vmul.f32 %v912, %v914
    %v916 = vadd.f32 %v915, -0.16666654
    %v917 = vmul.f32 %v912, %v916
    %v918 = vadd.f32 %v917, 1.0
    %v919 = vmul.f32 %v918, %v903
    %vm920 = vweird.f32 %v159
    %v921 = vand.u32 %v904, 3
    %vm922 = vcmp.lt.s32.totalorder %v921, 2
    %vm923 = vcmp.eq.s32.totalorder %v921, 0
    %v924 = vxor.u32 %v919, 2147483648
    %v925 = vsel %vm923, %v911, %v924
    %vm926 = vcmp.eq.s32.totalorder %v921, 2
    %v927 = vxor.u32 %v911, 2147483648
    %v928 = vsel %vm926, %v927, %v919
    %v929 = vsel %vm922, %v925, %v928
    %v930 = vsel %vm920, nan, %v929
    %v931 = vand.u32 2147483647, %v160
    %vm932 = vcmp.le.f32.partialorder %v931, 0.7853982
    %vm933 = vcmp.lt.s32.totalorder %v160, 0
    %v934 = vand.u32 %v160, 2139095040
    %v935 = vshrl.u32 %v934, 23
    %v936 = vsub.s32 %v935, 127
    %v937 = vand.u32 2147483647, %v160
    %v938 = vand.u32 %v937, 8388607
    %v939 = vor.u32 %v938, 8388608
    %v940 = vsub.s32 0, %v939
    %v941 = vadd.s32 %v936, 1
    %vm942 = vcmp.gt.s32.totalorder %v941, 0
    %v943 = vsel %vm942, %v941, 0
    %v944 = vshrl.u32 %v943, 5
    %v945 = vand.u32 %v943, 31
    %v946 = vsub.s32 32, %v945
    %v947 = vshrl.u32 683565275, %v946
    %v948 = vshll.u32 683565275, %v945
    %v949 = vshrl.u32 2475754826, %v946
    %v950 = vor.u32 %v948, %v949
    %v951 = vshll.u32 2475754826, %v945
    %v952 = vshrl.u32 2131351028, %v946
    %v953 = vor.u32 %v951, %v952
    %v954 = vshll.u32 2131351028, %v945
    %v955 = vshrl.u32 2102212464, %v946
    %v956 = vor.u32 %v954, %v955
    %v957 = vshll.u32 2102212464, %v945
    %v958 = vshrl.u32 920167782, %v946
    %v959 = vor.u32 %v957, %v958
    %v960 = vshll.u32 920167782, %v945
    %v961 = vshrl.u32 1326507024, %v946
    %v962 = vor.u32 %v960, %v961
    %vm963 = vcmp.lt.s32.totalorder %v944, 1
    %vm964 = vcmp.lt.s32.totalorder %v944, 2
    %vm965 = vcmp.lt.s32.totalorder %v944, 3
    %vm966 = vcmp.lt.s32.totalorder %v944, 4
    %v967 = vsel %vm963, %v947, %v950
    %v968 = vsel %vm966, %v956, 2102212464
    %v969 = vsel %vm965, %v953, %v968
    %v970 = vsel %vm964, %v967, %v969
    %v971 = vsel %vm963, %v950, %v953
    %v972 = vsel %vm966, %v959, 920167782
    %v973 = vsel %vm965, %v956, %v972
    %v974 = vsel %vm964, %v971, %v973
    %v975 = vsel %vm963, %v953, %v956
    %v976 = vsel %vm966, %v962, 1326507024
    %v977 = vsel %vm965, %v959, %v976
    %v978 = vsel %vm964, %v975, %v977
    %v979 = vshll.u32 %v939, 8
    %v980 = vand.u32 %v979, 65535
    %v981 = vshrl.u32 %v979, 16
    %v982 = vand.u32 %v978, 65535
    %v983 = vshrl.u32 %v978, 16
    %v984 = vmul.u32 %v980, %v982
    %v985 = vmul.u32 %v980, %v983
    %v986 = vmul.u32 %v981, %v982
    %v987 = vmul.u32 %v981, %v983
    %v988 = vshll.u32 %v985, 16
    %v989 = vshrl.u32 %v985, 16
    %v990 = vshll.u32 %v986, 16
    %v991 = vshrl.u32 %v986, 16
    %vm992 = vc.u32 %v984, %v988
    %v993 = vsel %vm992, 1, 0
    %v994 = vadd.s32 %v984, %v988
    %v995 = vadd.s32 %v987, %v993
    %vm996 = vc.u32 %v994, %v990
    %v997 = vsel %vm996, 1, 0
    %v998 = vadd.s32 %v994, %v990
    %v999 = vadd.s32 %v995, %v997
    %v1000 = vadd.s32 %v999, %v989
    %v1001 = vadd.s32 %v1000, %v991
    %v1002 = vand.u32 %v979, 65535
    %v1003 = vshrl.u32 %v979, 16
    %v1004 = vand.u32 %v974, 65535
    %v1005 = vshrl.u32 %v974, 16
    %v1006 = vmul.u32 %v1002, %v1004
    %v1007 = vmul.u32 %v1002, %v1005
    %v1008 = vmul.u32 %v1003, %v1004
    %v1009 = vmul.u32 %v1003, %v1005
    %v1010 = vshll.u32 %v1007, 16
    %v1011 = vshrl.u32 %v1007, 16
    %v1012 = vshll.u32 %v1008, 16
    %v1013 = vshrl.u32 %v1008, 16
    %vm1014 = vc.u32 %v1006, %v1010
    %v1015 = vsel %vm1014, 1, 0
    %v1016 = vadd.s32 %v1006, %v1010
    %v1017 = vadd.s32 %v1009, %v1015
    %vm1018 = vc.u32 %v1016, %v1012
    %v1019 = vsel %vm1018, 1, 0
    %v1020 = vadd.s32 %v1016, %v1012
    %v1021 = vadd.s32 %v1017, %v1019
    %v1022 = vadd.s32 %v1021, %v1011
    %v1023 = vadd.s32 %v1022, %v1013
    %v1024 = vmul.u32 %v979, %v970
    %v1025 = vadd.s32 %v1001, %v1020
    %vm1026 = vc.u32 %v1001, %v1020
    %v1027 = vadd.s32 %v1023, 1
    %v1028 = vsel %vm1026, %v1027, %v1023
    %v1029 = vadd.s32 %v1024, %v1028
    %v1030 = vadd.s32 %v1029, 536870912
    %v1031 = vshrl.u32 %v1030, 30
    %v1032 = vshll.u32 %v1031, 30
    %v1033 = vsub.s32 %v1029, %v1032
    %vm1034 = vcmp.lt.s32.totalorder %v1033, 0
    %v1035 = vsub.s32 0, %v1033
    %v1036 = vsel %vm1034, %v1035, %v1033
    %v1037 = vclz %v1036
    %v1038 = vsub.s32 %v1037, 2
    %vm1039 = vcmp.gt.s32.totalorder 0, %v1038
    %v1040 = vsel %vm1039, 0, %v1038
    %v1041 = vsub.s32 32, %v1040
    %v1042 = vshll.u32 %v1033, %v1040
    %v1043 = vshrl.u32 %v1025, %v1041
    %v1044 = vor.u32 %v1042, %v1043
    %v1045 = vsub.s32 4294967266, %v1040
    %v1046 = vadd.s32 %v1045, 127
    %v1047 = vshll.u32 %v1046, 23
    %v1048 = vor.u32 4788187, %v1047
    %v1049 = vand.u32 2147483647, %v1048
    %v1051 = vcvt.s32.f32 %v1044
    %v1052 = vmul.f32 %v1051, %v1049
    %v1053 = vxor.u32 %v1052, 2147483648
    %v1054 = vsel %vm933, %v1053, %v1052
    %v1055 = vsub.s32 4, %v1031
    %v1056 = vsel %vm933, %v1055, %v1031
    %v1057 = vsel %vm932, %v160, %v1054
    %v1058 = vsel %vm932, 0, %v1056
    %v1059 = vmul.f32 %v1057, %v1057
    %v1060 = vmul.f32 %v1059, -0.001358992
    %v1061 = vadd.f32 %v1060, 0.041655596
    %v1062 = vmul.f32 %v1059, %v1061
    %v1063 = vadd.f32 %v1062, -0.4999988
    %v1064 = vmul.f32 %v1059, %v1063
    %v1065 = vadd.f32 1.0, %v1064
    %v1066 = vmul.f32 %v1057, %v1057
    %v1067 = vmul.f32 %v1066, -0.00019511016
    %v1068 = vadd.f32 %v1067, 0.008332121
    %v1069 = vmul.f32 %v1066, %v1068
    %v1070 = vadd.f32 %v1069, -0.16666654
    %v1071 = vmul.f32 %v1066, %v1070
    %v1072 = vadd.f32 %v1071, 1.0
    %v1073 = vmul.f32 %v1072, %v1057
    %vm1074 = vweird.f32 %v160
    %v1075 = vand.u32 %v1058, 3
    %vm1076 = vcmp.lt.s32.totalorder %v1075, 2
    %vm1077 = vcmp.eq.s32.totalorder %v1075, 0
    %v1078 = vxor.u32 %v1073, 2147483648
    %v1079 = vsel %vm1077, %v1065, %v1078
    %vm1080 = vcmp.eq.s32.totalorder %v1075, 2
    %v1081 = vxor.u32 %v1065, 2147483648
    %v1082 = vsel %vm1080, %v1081, %v1073
    %v1083 = vsel %vm1076, %v1079, %v1082
    %v1084 = vsel %vm1074, nan, %v1083
    %v1085 = vld [vmem:[%s2 + $0x18] sm:$0xff]
    %v1086 = vld [vmem:[%s2 + $0x20] sm:$0xff]
    %v1087 = vld [vmem:[%s2 + $0x28] sm:$0xff]
    %v1088 = vld [vmem:[%s2 + $0x30] sm:$0xff]
    %v1089 = vpack.c.bf16 %v1086, %v1085
    %v1090 = vpack.c.bf16 %v1088, %v1087
    %v1091 = vpack.c.bf16 %v468, %v314
    %v1092 = vpack.c.bf16 %v776, %v622
    %v1093 = vpack.c.bf16 %v1084, %v930
    %v1094 = vld [vmem:[%s2 + $0x10] sm:$0x1]
    %v1095 = vperm.slane %v1094, 0
    %vm1096 = vcmask 261120
    %v1098 = vsel %vm1096, %v1091, 0
    %v1101 = vsel %vm1096, %v1092, 0
    %v1104 = vsel %vm1096, %v1093, 0
    %1106 = vmatpush.bf16.msra.mxu0 0
    %1107 = vmatpush.bf16.msra.mxu0 0
    %1108 = vmatpush.bf16.msra.mxu0 0
    %1109 = vmatpush.bf16.msra.mxu0 0
    %1110 = vmatpush.bf16.msra.mxu0 0
    %1111 = vmatpush.bf16.msra.mxu0 0
    %1112 = vmatpush.bf16.msra.mxu0 %v1090
    %1113 = vmatpush.bf16.msra.mxu0 %v1089
    %1114 = vmatmul.bf16.gmra.mxu0 %v1098
    %v1115 = vpop.f32.mrf.mxu0
    %v1116 = vadd.f32 %v1095, %v1115
    %v1117 = vpop.f32.mrf.mxu0
    %v1118 = vadd.f32 %v1095, %v1117
    %1119 = vmatmul.bf16.gmra.mxu0 %v1101
    %v1120 = vpop.f32.mrf.mxu0
    %v1121 = vadd.f32 %v1095, %v1120
    %v1122 = vpop.f32.mrf.mxu0
    %v1123 = vadd.f32 %v1095, %v1122
    %1124 = vmatmul.bf16.gmra.mxu0 %v1104
    %v1125 = vpop.f32.mrf.mxu0
    %v1126 = vadd.f32 %v1095, %v1125
    %v1127 = vpop.f32.mrf.mxu0
    %v1128 = vadd.f32 %v1095, %v1127
    %1129 = vdwg.mxu0
    %v1130 = vpack.c.bf16 %v1118, %v1116
    %v1131 = vpack.c.bf16 %v1123, %v1121
    %v1132 = vpack.c.bf16 %v1128, %v1126
    %v1133 = vld [vmem:[%s6] sm:$0xff]
    %v1134 = vld [vmem:[%s6 + $0x8] sm:$0xff]
    %v1135 = vld [vmem:[%s6 + $0x10] sm:$0xff]
    %v1136 = vld [vmem:[%s6 + $0x18] sm:$0xff]
    %v1141 = vunpack.c.l.b16 %v1133
    %v1142 = vunpack.c.h.b16 %v1133
    %v1143 = vunpack.c.l.b16 %v1134
    %v1144 = vunpack.c.h.b16 %v1134
    %v1145 = vunpack.c.l.b16 %v1135
    %v1146 = vunpack.c.h.b16 %v1135
    %v1147 = vunpack.c.l.b16 %v1136
    %v1148 = vunpack.c.h.b16 %v1136
    %v1149 = vpack.c.b16 %v1143, %v1141
    %v1150 = vpack.c.b16 %v1144, %v1142
    %v1151 = vpack.c.b16 %v1147, %v1145
    %v1152 = vpack.c.b16 %v1148, %v1146
    %v1158 = vsel %vm1096, %v1130, 0
    %v1161 = vsel %vm1096, %v1131, 0
    %v1164 = vsel %vm1096, %v1132, 0
    %1166 = vmatpush.bf16.msra.mxu0 0
    %1167 = vmatpush.bf16.msra.mxu0 0
    %1168 = vmatpush.bf16.msra.mxu0 0
    %1169 = vmatpush.bf16.msra.mxu0 0
    %1170 = vmatpush.bf16.msra.mxu0 0
    %1171 = vmatpush.bf16.msra.mxu0 0
    %1172 = vmatpush.bf16.msra.mxu0 %v1151
    %1173 = vmatpush.bf16.msra.mxu0 %v1149
    %1174 = vmatmul.bf16.gmra.mxu0 %v1158
    %v1175 = vpop.f32.mrf.mxu0
    %v1176 = vadd.f32 0.0, %v1175
    %v1177 = vpop.f32.mrf.mxu0
    %v1178 = vadd.f32 0.0, %v1177
    %1179 = vmatmul.bf16.gmra.mxu0 %v1161
    %v1180 = vpop.f32.mrf.mxu0
    %v1181 = vadd.f32 0.0, %v1180
    %v1182 = vpop.f32.mrf.mxu0
    %v1183 = vadd.f32 0.0, %v1182
    %1184 = vmatmul.bf16.gmra.mxu0 %v1164
    %v1185 = vpop.f32.mrf.mxu0
    %v1186 = vadd.f32 0.0, %v1185
    %v1187 = vpop.f32.mrf.mxu0
    %v1188 = vadd.f32 0.0, %v1187
    %1189 = vdwg.mxu0
    %1190 = vmatpush.bf16.msra.mxu0 0
    %1191 = vmatpush.bf16.msra.mxu0 0
    %1192 = vmatpush.bf16.msra.mxu0 0
    %1193 = vmatpush.bf16.msra.mxu0 0
    %1194 = vmatpush.bf16.msra.mxu0 0
    %1195 = vmatpush.bf16.msra.mxu0 0
    %1196 = vmatpush.bf16.msra.mxu0 %v1152
    %1197 = vmatpush.bf16.msra.mxu0 %v1150
    %1198 = vmatmul.bf16.gmra.mxu0 %v1158
    %v1199 = vpop.f32.mrf.mxu0
    %v1200 = vadd.f32 0.0, %v1199
    %v1201 = vpop.f32.mrf.mxu0
    %v1202 = vadd.f32 0.0, %v1201
    %1203 = vmatmul.bf16.gmra.mxu0 %v1161
    %v1204 = vpop.f32.mrf.mxu0
    %v1205 = vadd.f32 0.0, %v1204
    %v1206 = vpop.f32.mrf.mxu0
    %v1207 = vadd.f32 0.0, %v1206
    %1208 = vmatmul.bf16.gmra.mxu0 %v1164
    %v1209 = vpop.f32.mrf.mxu0
    %v1210 = vadd.f32 0.0, %v1209
    %v1211 = vpop.f32.mrf.mxu0
    %v1212 = vadd.f32 0.0, %v1211
    %1213 = vdwg.mxu0
    %v1214 = vld [vmem:[%s0] sm:$0xff]
    %v1215 = vld [vmem:[%s0 + $0x8] sm:$0xff]
    %v1216 = vpack.c.bf16 %v1215, %v1214
    %v1217 = vld [vmem:[#allocation2] sm:$0xff]
    %v1218 = vld [vmem:[#allocation2 + $0x8] sm:$0xff]
    %v1219 = vld [vmem:[#allocation2 + $0x10] sm:$0xff]
    %v1220 = vld [vmem:[#allocation2 + $0x18] sm:$0xff]
    %v1221 = vld [vmem:[#allocation2 + $0x20] sm:$0xff]
    %v1222 = vld [vmem:[#allocation2 + $0x28] sm:$0xff]
    %v1223 = vld [vmem:[#allocation2 + $0x30] sm:$0xff]
    %v1224 = vld [vmem:[#allocation2 + $0x38] sm:$0xff]
    %v1225 = vld [vmem:[#allocation2 + $0x40] sm:$0xff]
    %v1226 = vld [vmem:[#allocation2 + $0x48] sm:$0xff]
    %v1227 = vld [vmem:[#allocation2 + $0x50] sm:$0xff]
    %v1228 = vld [vmem:[#allocation2 + $0x58] sm:$0xff]
    %v1229 = vld [vmem:[#allocation2 + $0x60] sm:$0xff]
    %v1230 = vld [vmem:[#allocation2 + $0x68] sm:$0xff]
    %v1231 = vld [vmem:[#allocation2 + $0x70] sm:$0xff]
    %v1232 = vld [vmem:[#allocation2 + $0x78] sm:$0xff]
    %v1233 = vld [vmem:[%s4] ss:$8 sm:$0x3]
    %v1235 = vperm.slane %v1233, 0
    %v1236 = vperm.slane %v1233, 1
    %v1255 = vunpack.c.l.b16 %v1217
    %v1256 = vunpack.c.h.b16 %v1217
    %v1257 = vunpack.c.l.b16 %v1218
    %v1258 = vunpack.c.h.b16 %v1218
    %v1259 = vunpack.c.l.b16 %v1219
    %v1260 = vunpack.c.h.b16 %v1219
    %v1261 = vunpack.c.l.b16 %v1220
    %v1262 = vunpack.c.h.b16 %v1220
    %v1263 = vunpack.c.l.b16 %v1221
    %v1264 = vunpack.c.h.b16 %v1221
    %v1265 = vunpack.c.l.b16 %v1222
    %v1266 = vunpack.c.h.b16 %v1222
    %v1267 = vunpack.c.l.b16 %v1223
    %v1268 = vunpack.c.h.b16 %v1223
    %v1269 = vunpack.c.l.b16 %v1224
    %v1270 = vunpack.c.h.b16 %v1224
    %v1271 = vunpack.c.l.b16 %v1225
    %v1272 = vunpack.c.h.b16 %v1225
    %v1273 = vunpack.c.l.b16 %v1226
    %v1274 = vunpack.c.h.b16 %v1226
    %v1275 = vunpack.c.l.b16 %v1227
    %v1276 = vunpack.c.h.b16 %v1227
    %v1277 = vunpack.c.l.b16 %v1228
    %v1278 = vunpack.c.h.b16 %v1228
    %v1279 = vunpack.c.l.b16 %v1229
    %v1280 = vunpack.c.h.b16 %v1229
    %v1281 = vunpack.c.l.b16 %v1230
    %v1282 = vunpack.c.h.b16 %v1230
    %v1283 = vunpack.c.l.b16 %v1231
    %v1284 = vunpack.c.h.b16 %v1231
    %v1285 = vunpack.c.l.b16 %v1232
    %v1286 = vunpack.c.h.b16 %v1232
    %v1287 = vpack.c.b16 %v1257, %v1255
    %v1288 = vpack.c.b16 %v1258, %v1256
    %v1289 = vpack.c.b16 %v1261, %v1259
    %v1290 = vpack.c.b16 %v1262, %v1260
    %v1291 = vpack.c.b16 %v1265, %v1263
    %v1292 = vpack.c.b16 %v1266, %v1264
    %v1293 = vpack.c.b16 %v1269, %v1267
    %v1294 = vpack.c.b16 %v1270, %v1268
    %v1295 = vpack.c.b16 %v1273, %v1271
    %v1296 = vpack.c.b16 %v1274, %v1272
    %v1297 = vpack.c.b16 %v1277, %v1275
    %v1298 = vpack.c.b16 %v1278, %v1276
    %v1299 = vpack.c.b16 %v1281, %v1279
    %v1300 = vpack.c.b16 %v1282, %v1280
    %v1301 = vpack.c.b16 %v1285, %v1283
    %v1302 = vpack.c.b16 %v1286, %v1284
    %1319 = vmatpush.bf16.msra.mxu0 %v1301
    %1320 = vmatpush.bf16.msra.mxu0 %v1299
    %1321 = vmatpush.bf16.msra.mxu0 %v1297
    %1322 = vmatpush.bf16.msra.mxu0 %v1295
    %1323 = vmatpush.bf16.msra.mxu0 %v1293
    %1324 = vmatpush.bf16.msra.mxu0 %v1291
    %1325 = vmatpush.bf16.msra.mxu0 %v1289
    %1326 = vmatpush.bf16.msra.mxu0 %v1287
    %1327 = vmatmul.bf16.gmra.mxu0 %v1216
    %v1328 = vpop.f32.mrf.mxu0
    %v1329 = vadd.f32 %v1235, %v1328
    %v1330 = vpop.f32.mrf.mxu0
    %v1331 = vadd.f32 %v1235, %v1330
    %1332 = vdwg.mxu0
    %1333 = vmatpush.bf16.msra.mxu0 %v1302
    %1334 = vmatpush.bf16.msra.mxu0 %v1300
    %1335 = vmatpush.bf16.msra.mxu0 %v1298
    %1336 = vmatpush.bf16.msra.mxu0 %v1296
    %1337 = vmatpush.bf16.msra.mxu0 %v1294
    %1338 = vmatpush.bf16.msra.mxu0 %v1292
    %1339 = vmatpush.bf16.msra.mxu0 %v1290
    %1340 = vmatpush.bf16.msra.mxu0 %v1288
    %1341 = vmatmul.bf16.gmra.mxu0 %v1216
    %v1342 = vpop.f32.mrf.mxu0
    %v1343 = vadd.f32 %v1236, %v1342
    %v1344 = vpop.f32.mrf.mxu0
    %v1345 = vadd.f32 %v1236, %v1344
    %1346 = vdwg.mxu0
    %v1347 = vpack.c.bf16 %v1331, %v1329
    %v1348 = vld [vmem:[#allocation4] sm:$0xf]
    %v1349 = vld [vmem:[#allocation4 + $0x4] sm:$0xf]
    %v1350 = vld [vmem:[#allocation4 + $0x8] sm:$0xf]
    %v1351 = vld [vmem:[#allocation4 + $0xc] sm:$0xf]
    %v1352 = vld [vmem:[#allocation4 + $0x10] sm:$0xf]
    %v1353 = vld [vmem:[#allocation4 + $0x14] sm:$0xf]
    %v1354 = vld [vmem:[#allocation4 + $0x18] sm:$0xf]
    %v1355 = vld [vmem:[#allocation4 + $0x1c] sm:$0xf]
    %v1356 = vld [vmem:[#allocation4 + $0x20] sm:$0xf]
    %v1357 = vld [vmem:[#allocation4 + $0x24] sm:$0xf]
    %v1358 = vld [vmem:[#allocation4 + $0x28] sm:$0xf]
    %v1359 = vld [vmem:[#allocation4 + $0x2c] sm:$0xf]
    %v1360 = vld [vmem:[#allocation4 + $0x30] sm:$0xf]
    %v1361 = vld [vmem:[#allocation4 + $0x34] sm:$0xf]
    %v1362 = vld [vmem:[#allocation4 + $0x38] sm:$0xf]
    %v1363 = vld [vmem:[#allocation4 + $0x3c] sm:$0xf]
    %v1380 = vunpack.c.l.b16 %v1348
    %v1381 = vunpack.c.l.b16 %v1349
    %v1382 = vunpack.c.l.b16 %v1350
    %v1383 = vunpack.c.l.b16 %v1351
    %v1384 = vunpack.c.l.b16 %v1352
    %v1385 = vunpack.c.l.b16 %v1353
    %v1386 = vunpack.c.l.b16 %v1354
    %v1387 = vunpack.c.l.b16 %v1355
    %v1388 = vunpack.c.l.b16 %v1356
    %v1389 = vunpack.c.l.b16 %v1357
    %v1390 = vunpack.c.l.b16 %v1358
    %v1391 = vunpack.c.l.b16 %v1359
    %v1392 = vunpack.c.l.b16 %v1360
    %v1393 = vunpack.c.l.b16 %v1361
    %v1394 = vunpack.c.l.b16 %v1362
    %v1395 = vunpack.c.l.b16 %v1363
    %v1396 = vpack.c.b16 %v1381, %v1380
    %v1397 = vpack.c.b16 %v1383, %v1382
    %v1398 = vpack.c.b16 %v1385, %v1384
    %v1399 = vpack.c.b16 %v1387, %v1386
    %v1400 = vpack.c.b16 %v1389, %v1388
    %v1401 = vpack.c.b16 %v1391, %v1390
    %v1402 = vpack.c.b16 %v1393, %v1392
    %v1403 = vpack.c.b16 %v1395, %v1394
    %1412 = vmatpush.bf16.msra.mxu0 %v1403
    %1413 = vmatpush.bf16.msra.mxu0 %v1402
    %1414 = vmatpush.bf16.msra.mxu0 %v1401
    %1415 = vmatpush.bf16.msra.mxu0 %v1400
    %1416 = vmatpush.bf16.msra.mxu0 %v1399
    %1417 = vmatpush.bf16.msra.mxu0 %v1398
    %1418 = vmatpush.bf16.msra.mxu0 %v1397
    %1419 = vmatpush.bf16.msra.mxu0 %v1396
    %1420 = vmatmul.bf16.gmra.mxu0 %v1347
    %v1421 = vpop.f32.mrf.mxu0
    %v1422 = vadd.f32 0.0, %v1421
    %v1423 = vpop.f32.mrf.mxu0
    %v1424 = vadd.f32 0.0, %v1423
    %1425 = vdwg.mxu0
    %v1426 = vpack.c.bf16 %v1424, %v1422
    %v1433 = vunpack.c.l.b16 %v81
    %v1434 = vunpack.c.l.b16 %v82
    %v1435 = vunpack.c.l.b16 %v83
    %v1436 = vunpack.c.l.b16 %v84
    %v1437 = vunpack.c.l.b16 %v85
    %v1438 = vunpack.c.l.b16 %v86
    %v1439 = vpack.c.b16 %v1434, %v1433
    %v1440 = vpack.c.b16 %v1436, %v1435
    %v1441 = vpack.c.b16 %v1438, %v1437
    %vm1442 = vcmask 130048
    %v1444 = vsel %vm1442, %v1439, 0
    %v1447 = vsel %vm1442, %v1440, 0
    %v1450 = vsel %vm1442, %v1441, 0
    %1452 = vmatpush.bf16.msra.mxu0 0
    %1453 = vmatpush.bf16.msra.mxu0 0
    %1454 = vmatpush.bf16.msra.mxu0 0
    %1455 = vmatpush.bf16.msra.mxu0 0
    %1456 = vmatpush.bf16.msra.mxu0 0
    %1457 = vmatpush.bf16.msra.mxu0 0
    %1458 = vmatpush.bf16.msra.mxu0 0
    %1459 = vmatpush.bf16.msra.mxu0 %v1426
    %1460 = vmatmul.bf16.gmra.mxu0 %v1444
    %v1461 = vpop.f32.mrf.mxu0
    %v1462 = vadd.f32 0.0, %v1461
    %v1463 = vpop.f32.mrf.mxu0
    %v1464 = vadd.f32 0.0, %v1463
    %1465 = vmatmul.bf16.gmra.mxu0 %v1447
    %v1466 = vpop.f32.mrf.mxu0
    %v1467 = vadd.f32 0.0, %v1466
    %v1468 = vpop.f32.mrf.mxu0
    %v1469 = vadd.f32 0.0, %v1468
    %1470 = vmatmul.bf16.gmra.mxu0 %v1450
    %v1471 = vpop.f32.mrf.mxu0
    %v1472 = vadd.f32 0.0, %v1471
    %v1473 = vpop.f32.mrf.mxu0
    %v1474 = vadd.f32 0.0, %v1473
    %1475 = vdwg.mxu0
    %v1476 = vadd.f32 %v1176, %v1462
    %v1477 = vadd.f32 %v1178, %v1464
    %v1478 = vadd.f32 %v1181, %v1467
    %v1479 = vadd.f32 %v1183, %v1469
    %v1480 = vadd.f32 %v1186, %v1472
    %v1481 = vadd.f32 %v1188, %v1474
    %v1482 = vpack.c.bf16 %v1476, %v1476
    %v1483 = vpack.c.bf16 %v1477, %v1477
    %v1484 = vpack.c.bf16 %v1478, %v1478
    %v1485 = vpack.c.bf16 %v1479, %v1479
    %v1486 = vpack.c.bf16 %v1480, %v1480
    %v1487 = vpack.c.bf16 %v1481, %v1481
    %v1488 = vunpack.c.l.bf16 %v1482
    %v1489 = vunpack.c.l.bf16 %v1483
    %v1490 = vunpack.c.l.bf16 %v1484
    %v1491 = vunpack.c.l.bf16 %v1485
    %v1492 = vunpack.c.l.bf16 %v1486
    %v1493 = vunpack.c.l.bf16 %v1487
    %v1494 = vunpack.c.l.bf16 %v87
    %v1495 = vunpack.c.l.bf16 %v88
    %v1496 = vunpack.c.l.bf16 %v89
    %v1497 = vunpack.c.l.bf16 %v90
    %v1498 = vunpack.c.l.bf16 %v91
    %v1499 = vunpack.c.l.bf16 %v92
    %v1500 = vmul.f32 %v1488, %v1494
    %v1501 = vmul.f32 %v1489, %v1495
    %v1502 = vmul.f32 %v1490, %v1496
    %v1503 = vmul.f32 %v1491, %v1497
    %v1504 = vmul.f32 %v1492, %v1498
    %v1505 = vmul.f32 %v1493, %v1499
    %v1506 = vpack.c.bf16 %v1501, %v1500
    %v1507 = vpack.c.bf16 %v1503, %v1502
    %v1508 = vpack.c.bf16 %v1505, %v1504
    %v1511 = vunpack.c.l.b16 %v77
    %v1512 = vunpack.c.l.b16 %v78
    %v1513 = vpack.c.b16 %v1512, %v1511
    %vm1514 = vcmask 392192
    %v1516 = vsel %vm1514, %v1513, 0
    %1518 = vmatpush.bf16.msra.mxu0 0
    %1519 = vmatpush.bf16.msra.mxu0 0
    %1520 = vmatpush.bf16.msra.mxu0 0
    %1521 = vmatpush.bf16.msra.mxu0 0
    %1522 = vmatpush.bf16.msra.mxu0 0
    %1523 = vmatpush.bf16.msra.mxu0 %v1508
    %1524 = vmatpush.bf16.msra.mxu0 %v1507
    %1525 = vmatpush.bf16.msra.mxu0 %v1506
    %1526 = vmatmul.bf16.gmra.mxu0 %v1516
    %v1527 = vpop.f32.mrf.mxu0
    %v1528 = vadd.f32 0.0, %v1527
    %v1529 = vpop.f32.mrf.mxu0
    %v1530 = vadd.f32 0.0, %v1529
    %1531 = vdwg.mxu0
    %1534 = vrot.lane.b32.xlu0 %v1528, 64
    %v1535 = vpop.permute.xlu0 %1534
    %1536 = vrot.lane.b32.xlu0 %v1530, 64
    %v1537 = vpop.permute.xlu0 %1536
    %v1540 = vadd.f32 %v1422, %v1535
    %v1541 = vadd.f32 %v1424, %v1537
    %v1542 = vmul.f32 %v1540, 0.2
    %v1543 = vmul.f32 %v1541, 0.2
    %v1544 = vmax.f32 %v1540, %v1542
    %v1545 = vmax.f32 %v1541, %v1543
    %v1546 = vunpack.c.l.bf16 %v79
    %v1547 = vunpack.c.l.bf16 %v80
    %vm1548 = vcmp.gt.f32.partialorder %v1546, 0.5
    %vm1549 = vcmp.gt.f32.partialorder %v1547, 0.5
    %1552 = vrot.lane.b32.xlu0 %v1544, 64
    %v1553 = vpop.permute.xlu0 %1552
    %1554 = vrot.lane.b32.xlu0 %v1545, 64
    %v1555 = vpop.permute.xlu0 %1554
    %v1558 = vsel %vm1548, %v1553, -1e+30
    %v1559 = vsel %vm1549, %v1555, -1e+30
    %vm1560 = vcmask 523264
    %v1561 = vsel %vm1560, %v1558, -inf
    %1562 = vmax.xlane.f32.xlu0 %v1561
    %v1563 = vpop.xlane.xlu0 %1562
    %v1564 = vsel %vm1560, %v1559, -inf
    %1565 = vmax.xlane.f32.xlu0 %v1564
    %v1566 = vpop.xlane.xlu0 %1565
    %v1567 = vmax.f32 %v1563, 0.0
    %v1568 = vmax.f32 %v1566, 0.0
    %v1569 = vsub.f32 %v1558, %v1567
    %v1570 = vsub.f32 %v1559, %v1568
    %v1571 = vmul.f32 %v1569, 1.442695
    %v1572 = vpow.pop %v1571
    %v1573 = vmul.f32 %v1570, 1.442695
    %v1574 = vpow.pop %v1573
    %v1575 = vpack.c.bf16 %v1574, %v1572
    %v1584 = vunpack.c.l.b16 %v93
    %v1585 = vunpack.c.l.b16 %v94
    %v1586 = vunpack.c.l.b16 %v95
    %v1587 = vunpack.c.l.b16 %v96
    %v1588 = vunpack.c.l.b16 %v97
    %v1589 = vunpack.c.l.b16 %v98
    %v1590 = vunpack.c.l.b16 %v99
    %v1591 = vunpack.c.l.b16 %v100
    %v1592 = vpack.c.b16 %v1585, %v1584
    %v1593 = vpack.c.b16 %v1587, %v1586
    %v1594 = vpack.c.b16 %v1589, %v1588
    %v1595 = vpack.c.b16 %v1591, %v1590
    %v1597 = vsel %vm1442, %v1592, 0
    %v1600 = vsel %vm1442, %v1593, 0
    %v1603 = vsel %vm1442, %v1594, 0
    %v1606 = vsel %vm1442, %v1595, 0
    %1608 = vmatpush.bf16.msra.mxu0 0
    %1609 = vmatpush.bf16.msra.mxu0 0
    %1610 = vmatpush.bf16.msra.mxu0 0
    %1611 = vmatpush.bf16.msra.mxu0 0
    %1612 = vmatpush.bf16.msra.mxu0 0
    %1613 = vmatpush.bf16.msra.mxu0 0
    %1614 = vmatpush.bf16.msra.mxu0 0
    %1615 = vmatpush.bf16.msra.mxu0 %v1347
    %1616 = vmatmul.bf16.gmra.mxu0 %v1597
    %v1617 = vpop.f32.mrf.mxu0
    %v1618 = vadd.f32 0.0, %v1617
    %v1619 = vpop.f32.mrf.mxu0
    %v1620 = vadd.f32 0.0, %v1619
    %1621 = vmatmul.bf16.gmra.mxu0 %v1600
    %v1622 = vpop.f32.mrf.mxu0
    %v1623 = vadd.f32 0.0, %v1622
    %v1624 = vpop.f32.mrf.mxu0
    %v1625 = vadd.f32 0.0, %v1624
    %1626 = vmatmul.bf16.gmra.mxu0 %v1603
    %v1627 = vpop.f32.mrf.mxu0
    %v1628 = vadd.f32 0.0, %v1627
    %v1629 = vpop.f32.mrf.mxu0
    %v1630 = vadd.f32 0.0, %v1629
    %1631 = vmatmul.bf16.gmra.mxu0 %v1606
    %v1632 = vpop.f32.mrf.mxu0
    %v1633 = vadd.f32 0.0, %v1632
    %v1634 = vpop.f32.mrf.mxu0
    %v1635 = vadd.f32 0.0, %v1634
    %1636 = vdwg.mxu0
    %v1637 = vpack.c.bf16 %v1618, %v1618
    %v1638 = vpack.c.bf16 %v1620, %v1620
    %v1639 = vpack.c.bf16 %v1623, %v1623
    %v1640 = vpack.c.bf16 %v1625, %v1625
    %v1641 = vpack.c.bf16 %v1628, %v1628
    %v1642 = vpack.c.bf16 %v1630, %v1630
    %v1643 = vpack.c.bf16 %v1633, %v1633
    %v1644 = vpack.c.bf16 %v1635, %v1635
    %v1645 = vunpack.c.l.bf16 %v1637
    %v1646 = vunpack.c.l.bf16 %v1638
    %v1647 = vunpack.c.l.bf16 %v1639
    %v1648 = vunpack.c.l.bf16 %v1640
    %v1649 = vunpack.c.l.bf16 %v1641
    %v1650 = vunpack.c.l.bf16 %v1642
    %v1651 = vunpack.c.l.bf16 %v1643
    %v1652 = vunpack.c.l.bf16 %v1644
    %v1653 = vunpack.c.l.bf16 %v101
    %v1654 = vunpack.c.l.bf16 %v102
    %v1655 = vunpack.c.l.bf16 %v103
    %v1656 = vunpack.c.l.bf16 %v104
    %v1657 = vunpack.c.l.bf16 %v105
    %v1658 = vunpack.c.l.bf16 %v106
    %v1659 = vunpack.c.l.bf16 %v107
    %v1660 = vunpack.c.l.bf16 %v108
    %v1661 = vmul.f32 %v1645, %v1653
    %v1662 = vmul.f32 %v1646, %v1654
    %v1663 = vmul.f32 %v1647, %v1655
    %v1664 = vmul.f32 %v1648, %v1656
    %v1665 = vmul.f32 %v1649, %v1657
    %v1666 = vmul.f32 %v1650, %v1658
    %v1667 = vmul.f32 %v1651, %v1659
    %v1668 = vmul.f32 %v1652, %v1660
    %v1669 = vpack.c.bf16 %v1662, %v1661
    %v1670 = vpack.c.bf16 %v1664, %v1663
    %v1671 = vpack.c.bf16 %v1666, %v1665
    %v1672 = vpack.c.bf16 %v1668, %v1667
    %v1674 = vsel %vm1560, %v1575, 0
    %1676 = vmatpush.bf16.msra.mxu0 0
    %1677 = vmatpush.bf16.msra.mxu0 0
    %1678 = vmatpush.bf16.msra.mxu0 0
    %1679 = vmatpush.bf16.msra.mxu0 0
    %1680 = vmatpush.bf16.msra.mxu0 %v1672
    %1681 = vmatpush.bf16.msra.mxu0 %v1671
    %1682 = vmatpush.bf16.msra.mxu0 %v1670
    %1683 = vmatpush.bf16.msra.mxu0 %v1669
    %1684 = vmatmul.bf16.gmra.mxu0 %v1674
    %v1685 = vpop.f32.mrf.mxu0
    %v1686 = vadd.f32 0.0, %v1685
    %v1687 = vpop.f32.mrf.mxu0
    %v1688 = vadd.f32 0.0, %v1687
    %1689 = vdwg.mxu0
    %v1698 = vunpack.c.l.b16 %v101
    %v1699 = vunpack.c.l.b16 %v102
    %v1700 = vunpack.c.l.b16 %v103
    %v1701 = vunpack.c.l.b16 %v104
    %v1702 = vunpack.c.l.b16 %v105
    %v1703 = vunpack.c.l.b16 %v106
    %v1704 = vunpack.c.l.b16 %v107
    %v1705 = vunpack.c.l.b16 %v108
    %v1706 = vpack.c.b16 %v1699, %v1698
    %v1707 = vpack.c.b16 %v1701, %v1700
    %v1708 = vpack.c.b16 %v1703, %v1702
    %v1709 = vpack.c.b16 %v1705, %v1704
    %1714 = vmatpush.bf16.msra.mxu0 0
    %1715 = vmatpush.bf16.msra.mxu0 0
    %1716 = vmatpush.bf16.msra.mxu0 0
    %1717 = vmatpush.bf16.msra.mxu0 0
    %1718 = vmatpush.bf16.msra.mxu0 %v1709
    %1719 = vmatpush.bf16.msra.mxu0 %v1708
    %1720 = vmatpush.bf16.msra.mxu0 %v1707
    %1721 = vmatpush.bf16.msra.mxu0 %v1706
    %1722 = vmatmul.bf16.gmra.mxu0 %v1674
    %v1723 = vpop.f32.mrf.mxu0
    %v1724 = vadd.f32 0.0, %v1723
    %v1725 = vpop.f32.mrf.mxu0
    %v1726 = vadd.f32 0.0, %v1725
    %1727 = vdwg.mxu0
    %vm1728 = vcmp.gt.f32.partialorder %v1724, 0.0
    %vm1729 = vcmp.gt.f32.partialorder %v1726, 0.0
    %v1730 = vsel %vm1728, %v1724, 1.0
    %v1731 = vsel %vm1729, %v1726, 1.0
    %v1732 = vrcp.pop %v1730
    %v1733 = vrcp.pop %v1731
    %v1734 = vmul.f32 %v1686, %v1732
    %v1735 = vmul.f32 %v1688, %v1733
    %v1736 = vadd.f32 %v1343, %v1734
    %v1737 = vadd.f32 %v1345, %v1735
    %v1738 = vmax.f32 %v1736, 0.0
    %v1739 = vmax.f32 %v1737, 0.0
    %v1740 = vpack.c.bf16 %v1739, %v1738
    %v1741 = vld [vmem:[#allocation2 + $0x80] sm:$0xff]
    %v1742 = vld [vmem:[#allocation2 + $0x88] sm:$0xff]
    %v1743 = vld [vmem:[#allocation2 + $0x90] sm:$0xff]
    %v1744 = vld [vmem:[#allocation2 + $0x98] sm:$0xff]
    %v1745 = vld [vmem:[#allocation2 + $0xa0] sm:$0xff]
    %v1746 = vld [vmem:[#allocation2 + $0xa8] sm:$0xff]
    %v1747 = vld [vmem:[#allocation2 + $0xb0] sm:$0xff]
    %v1748 = vld [vmem:[#allocation2 + $0xb8] sm:$0xff]
    %v1749 = vld [vmem:[#allocation2 + $0xc0] sm:$0xff]
    %v1750 = vld [vmem:[#allocation2 + $0xc8] sm:$0xff]
    %v1751 = vld [vmem:[#allocation2 + $0xd0] sm:$0xff]
    %v1752 = vld [vmem:[#allocation2 + $0xd8] sm:$0xff]
    %v1753 = vld [vmem:[#allocation2 + $0xe0] sm:$0xff]
    %v1754 = vld [vmem:[#allocation2 + $0xe8] sm:$0xff]
    %v1755 = vld [vmem:[#allocation2 + $0xf0] sm:$0xff]
    %v1756 = vld [vmem:[#allocation2 + $0xf8] sm:$0xff]
    %s1757 = scalar_lea.vmem %s4, 16
    %v1758 = vld [vmem:[%s1757] ss:$8 sm:$0x3]
    %v1760 = vperm.slane %v1758, 0
    %v1761 = vperm.slane %v1758, 1
    %v1780 = vunpack.c.l.b16 %v1741
    %v1781 = vunpack.c.h.b16 %v1741
    %v1782 = vunpack.c.l.b16 %v1742
    %v1783 = vunpack.c.h.b16 %v1742
    %v1784 = vunpack.c.l.b16 %v1743
    %v1785 = vunpack.c.h.b16 %v1743
    %v1786 = vunpack.c.l.b16 %v1744
    %v1787 = vunpack.c.h.b16 %v1744
    %v1788 = vunpack.c.l.b16 %v1745
    %v1789 = vunpack.c.h.b16 %v1745
    %v1790 = vunpack.c.l.b16 %v1746
    %v1791 = vunpack.c.h.b16 %v1746
    %v1792 = vunpack.c.l.b16 %v1747
    %v1793 = vunpack.c.h.b16 %v1747
    %v1794 = vunpack.c.l.b16 %v1748
    %v1795 = vunpack.c.h.b16 %v1748
    %v1796 = vunpack.c.l.b16 %v1749
    %v1797 = vunpack.c.h.b16 %v1749
    %v1798 = vunpack.c.l.b16 %v1750
    %v1799 = vunpack.c.h.b16 %v1750
    %v1800 = vunpack.c.l.b16 %v1751
    %v1801 = vunpack.c.h.b16 %v1751
    %v1802 = vunpack.c.l.b16 %v1752
    %v1803 = vunpack.c.h.b16 %v1752
    %v1804 = vunpack.c.l.b16 %v1753
    %v1805 = vunpack.c.h.b16 %v1753
    %v1806 = vunpack.c.l.b16 %v1754
    %v1807 = vunpack.c.h.b16 %v1754
    %v1808 = vunpack.c.l.b16 %v1755
    %v1809 = vunpack.c.h.b16 %v1755
    %v1810 = vunpack.c.l.b16 %v1756
    %v1811 = vunpack.c.h.b16 %v1756
    %v1812 = vpack.c.b16 %v1782, %v1780
    %v1813 = vpack.c.b16 %v1783, %v1781
    %v1814 = vpack.c.b16 %v1786, %v1784
    %v1815 = vpack.c.b16 %v1787, %v1785
    %v1816 = vpack.c.b16 %v1790, %v1788
    %v1817 = vpack.c.b16 %v1791, %v1789
    %v1818 = vpack.c.b16 %v1794, %v1792
    %v1819 = vpack.c.b16 %v1795, %v1793
    %v1820 = vpack.c.b16 %v1798, %v1796
    %v1821 = vpack.c.b16 %v1799, %v1797
    %v1822 = vpack.c.b16 %v1802, %v1800
    %v1823 = vpack.c.b16 %v1803, %v1801
    %v1824 = vpack.c.b16 %v1806, %v1804
    %v1825 = vpack.c.b16 %v1807, %v1805
    %v1826 = vpack.c.b16 %v1810, %v1808
    %v1827 = vpack.c.b16 %v1811, %v1809
    %1844 = vmatpush.bf16.msra.mxu0 %v1826
    %1845 = vmatpush.bf16.msra.mxu0 %v1824
    %1846 = vmatpush.bf16.msra.mxu0 %v1822
    %1847 = vmatpush.bf16.msra.mxu0 %v1820
    %1848 = vmatpush.bf16.msra.mxu0 %v1818
    %1849 = vmatpush.bf16.msra.mxu0 %v1816
    %1850 = vmatpush.bf16.msra.mxu0 %v1814
    %1851 = vmatpush.bf16.msra.mxu0 %v1812
    %1852 = vmatmul.bf16.gmra.mxu0 %v1740
    %v1853 = vpop.f32.mrf.mxu0
    %v1854 = vadd.f32 %v1760, %v1853
    %v1855 = vpop.f32.mrf.mxu0
    %v1856 = vadd.f32 %v1760, %v1855
    %1857 = vdwg.mxu0
    %1858 = vmatpush.bf16.msra.mxu0 %v1827
    %1859 = vmatpush.bf16.msra.mxu0 %v1825
    %1860 = vmatpush.bf16.msra.mxu0 %v1823
    %1861 = vmatpush.bf16.msra.mxu0 %v1821
    %1862 = vmatpush.bf16.msra.mxu0 %v1819
    %1863 = vmatpush.bf16.msra.mxu0 %v1817
    %1864 = vmatpush.bf16.msra.mxu0 %v1815
    %1865 = vmatpush.bf16.msra.mxu0 %v1813
    %1866 = vmatmul.bf16.gmra.mxu0 %v1740
    %v1867 = vpop.f32.mrf.mxu0
    %v1868 = vadd.f32 %v1761, %v1867
    %v1869 = vpop.f32.mrf.mxu0
    %v1870 = vadd.f32 %v1761, %v1869
    %1871 = vdwg.mxu0
    %v1872 = vpack.c.bf16 %v1856, %v1854
    %v1873 = vld [vmem:[#allocation4 + $0x40] sm:$0xf]
    %v1874 = vld [vmem:[#allocation4 + $0x44] sm:$0xf]
    %v1875 = vld [vmem:[#allocation4 + $0x48] sm:$0xf]
    %v1876 = vld [vmem:[#allocation4 + $0x4c] sm:$0xf]
    %v1877 = vld [vmem:[#allocation4 + $0x50] sm:$0xf]
    %v1878 = vld [vmem:[#allocation4 + $0x54] sm:$0xf]
    %v1879 = vld [vmem:[#allocation4 + $0x58] sm:$0xf]
    %v1880 = vld [vmem:[#allocation4 + $0x5c] sm:$0xf]
    %v1881 = vld [vmem:[#allocation4 + $0x60] sm:$0xf]
    %v1882 = vld [vmem:[#allocation4 + $0x64] sm:$0xf]
    %v1883 = vld [vmem:[#allocation4 + $0x68] sm:$0xf]
    %v1884 = vld [vmem:[#allocation4 + $0x6c] sm:$0xf]
    %v1885 = vld [vmem:[#allocation4 + $0x70] sm:$0xf]
    %v1886 = vld [vmem:[#allocation4 + $0x74] sm:$0xf]
    %v1887 = vld [vmem:[#allocation4 + $0x78] sm:$0xf]
    %v1888 = vld [vmem:[#allocation4 + $0x7c] sm:$0xf]
    %v1905 = vunpack.c.l.b16 %v1873
    %v1906 = vunpack.c.l.b16 %v1874
    %v1907 = vunpack.c.l.b16 %v1875
    %v1908 = vunpack.c.l.b16 %v1876
    %v1909 = vunpack.c.l.b16 %v1877
    %v1910 = vunpack.c.l.b16 %v1878
    %v1911 = vunpack.c.l.b16 %v1879
    %v1912 = vunpack.c.l.b16 %v1880
    %v1913 = vunpack.c.l.b16 %v1881
    %v1914 = vunpack.c.l.b16 %v1882
    %v1915 = vunpack.c.l.b16 %v1883
    %v1916 = vunpack.c.l.b16 %v1884
    %v1917 = vunpack.c.l.b16 %v1885
    %v1918 = vunpack.c.l.b16 %v1886
    %v1919 = vunpack.c.l.b16 %v1887
    %v1920 = vunpack.c.l.b16 %v1888
    %v1921 = vpack.c.b16 %v1906, %v1905
    %v1922 = vpack.c.b16 %v1908, %v1907
    %v1923 = vpack.c.b16 %v1910, %v1909
    %v1924 = vpack.c.b16 %v1912, %v1911
    %v1925 = vpack.c.b16 %v1914, %v1913
    %v1926 = vpack.c.b16 %v1916, %v1915
    %v1927 = vpack.c.b16 %v1918, %v1917
    %v1928 = vpack.c.b16 %v1920, %v1919
    %1937 = vmatpush.bf16.msra.mxu0 %v1928
    %1938 = vmatpush.bf16.msra.mxu0 %v1927
    %1939 = vmatpush.bf16.msra.mxu0 %v1926
    %1940 = vmatpush.bf16.msra.mxu0 %v1925
    %1941 = vmatpush.bf16.msra.mxu0 %v1924
    %1942 = vmatpush.bf16.msra.mxu0 %v1923
    %1943 = vmatpush.bf16.msra.mxu0 %v1922
    %1944 = vmatpush.bf16.msra.mxu0 %v1921
    %1945 = vmatmul.bf16.gmra.mxu0 %v1872
    %v1946 = vpop.f32.mrf.mxu0
    %v1947 = vadd.f32 0.0, %v1946
    %v1948 = vpop.f32.mrf.mxu0
    %v1949 = vadd.f32 0.0, %v1948
    %1950 = vdwg.mxu0
    %v1951 = vpack.c.bf16 %v1949, %v1947
    %1952 = vmatpush.bf16.msra.mxu0 0
    %1953 = vmatpush.bf16.msra.mxu0 0
    %1954 = vmatpush.bf16.msra.mxu0 0
    %1955 = vmatpush.bf16.msra.mxu0 0
    %1956 = vmatpush.bf16.msra.mxu0 0
    %1957 = vmatpush.bf16.msra.mxu0 0
    %1958 = vmatpush.bf16.msra.mxu0 0
    %1959 = vmatpush.bf16.msra.mxu0 %v1951
    %1960 = vmatmul.bf16.gmra.mxu0 %v1444
    %v1961 = vpop.f32.mrf.mxu0
    %v1962 = vadd.f32 0.0, %v1961
    %v1963 = vpop.f32.mrf.mxu0
    %v1964 = vadd.f32 0.0, %v1963
    %1965 = vmatmul.bf16.gmra.mxu0 %v1447
    %v1966 = vpop.f32.mrf.mxu0
    %v1967 = vadd.f32 0.0, %v1966
    %v1968 = vpop.f32.mrf.mxu0
    %v1969 = vadd.f32 0.0, %v1968
    %1970 = vmatmul.bf16.gmra.mxu0 %v1450
    %v1971 = vpop.f32.mrf.mxu0
    %v1972 = vadd.f32 0.0, %v1971
    %v1973 = vpop.f32.mrf.mxu0
    %v1974 = vadd.f32 0.0, %v1973
    %1975 = vdwg.mxu0
    %1982 = vrot.lane.b32.xlu0 %v1962, 64
    %v1983 = vpop.permute.xlu0 %1982
    %1984 = vrot.lane.b32.xlu0 %v1964, 64
    %v1985 = vpop.permute.xlu0 %1984
    %1986 = vrot.lane.b32.xlu0 %v1967, 64
    %v1987 = vpop.permute.xlu0 %1986
    %1988 = vrot.lane.b32.xlu0 %v1969, 64
    %v1989 = vpop.permute.xlu0 %1988
    %1990 = vrot.lane.b32.xlu0 %v1972, 64
    %v1991 = vpop.permute.xlu0 %1990
    %1992 = vrot.lane.b32.xlu0 %v1974, 64
    %v1993 = vpop.permute.xlu0 %1992
    %v2000 = vadd.f32 %v1176, %v1983
    %v2001 = vadd.f32 %v1178, %v1985
    %v2002 = vadd.f32 %v1181, %v1987
    %v2003 = vadd.f32 %v1183, %v1989
    %v2004 = vadd.f32 %v1186, %v1991
    %v2005 = vadd.f32 %v1188, %v1993
    %v2006 = vpack.c.bf16 %v2000, %v2000
    %v2007 = vpack.c.bf16 %v2001, %v2001
    %v2008 = vpack.c.bf16 %v2002, %v2002
    %v2009 = vpack.c.bf16 %v2003, %v2003
    %v2010 = vpack.c.bf16 %v2004, %v2004
    %v2011 = vpack.c.bf16 %v2005, %v2005
    %v2012 = vunpack.c.l.bf16 %v2006
    %v2013 = vunpack.c.l.bf16 %v2007
    %v2014 = vunpack.c.l.bf16 %v2008
    %v2015 = vunpack.c.l.bf16 %v2009
    %v2016 = vunpack.c.l.bf16 %v2010
    %v2017 = vunpack.c.l.bf16 %v2011
    %2024 = vrot.lane.b32.xlu0 %v1494, 64
    %v2025 = vpop.permute.xlu0 %2024
    %2026 = vrot.lane.b32.xlu0 %v1495, 64
    %v2027 = vpop.permute.xlu0 %2026
    %2028 = vrot.lane.b32.xlu0 %v1496, 64
    %v2029 = vpop.permute.xlu0 %2028
    %2030 = vrot.lane.b32.xlu0 %v1497, 64
    %v2031 = vpop.permute.xlu0 %2030
    %2032 = vrot.lane.b32.xlu0 %v1498, 64
    %v2033 = vpop.permute.xlu0 %2032
    %2034 = vrot.lane.b32.xlu0 %v1499, 64
    %v2035 = vpop.permute.xlu0 %2034
    %v2042 = vmul.f32 %v2012, %v2025
    %v2043 = vmul.f32 %v2013, %v2027
    %v2044 = vmul.f32 %v2014, %v2029
    %v2045 = vmul.f32 %v2015, %v2031
    %v2046 = vmul.f32 %v2016, %v2033
    %v2047 = vmul.f32 %v2017, %v2035
    %v2048 = vpack.c.bf16 %v2043, %v2042
    %v2049 = vpack.c.bf16 %v2045, %v2044
    %v2050 = vpack.c.bf16 %v2047, %v2046
    %2054 = vrot.lane.b32.xlu0 %v2048, 64
    %v2055 = vpop.permute.xlu0 %2054
    %2056 = vrot.lane.b32.xlu0 %v2049, 64
    %v2057 = vpop.permute.xlu0 %2056
    %2058 = vrot.lane.b32.xlu0 %v2050, 64
    %v2059 = vpop.permute.xlu0 %2058
    %2063 = vmatpush.bf16.msra.mxu0 0
    %2064 = vmatpush.bf16.msra.mxu0 0
    %2065 = vmatpush.bf16.msra.mxu0 0
    %2066 = vmatpush.bf16.msra.mxu0 0
    %2067 = vmatpush.bf16.msra.mxu0 0
    %2068 = vmatpush.bf16.msra.mxu0 %v2059
    %2069 = vmatpush.bf16.msra.mxu0 %v2057
    %2070 = vmatpush.bf16.msra.mxu0 %v2055
    %2071 = vmatmul.bf16.gmra.mxu0 %v1516
    %v2072 = vpop.f32.mrf.mxu0
    %v2073 = vadd.f32 0.0, %v2072
    %v2074 = vpop.f32.mrf.mxu0
    %v2075 = vadd.f32 0.0, %v2074
    %2076 = vdwg.mxu0
    %2079 = vrot.lane.b32.xlu0 %v2073, 64
    %v2080 = vpop.permute.xlu0 %2079
    %2081 = vrot.lane.b32.xlu0 %v2075, 64
    %v2082 = vpop.permute.xlu0 %2081
    %v2085 = vadd.f32 %v1947, %v2080
    %v2086 = vadd.f32 %v1949, %v2082
    %v2087 = vmul.f32 %v2085, 0.2
    %v2088 = vmul.f32 %v2086, 0.2
    %v2089 = vmax.f32 %v2085, %v2087
    %v2090 = vmax.f32 %v2086, %v2088
    %2093 = vrot.lane.b32.xlu0 %v2089, 64
    %v2094 = vpop.permute.xlu0 %2093
    %2095 = vrot.lane.b32.xlu0 %v2090, 64
    %v2096 = vpop.permute.xlu0 %2095
    %v2099 = vsel %vm1548, %v2094, -1e+30
    %v2100 = vsel %vm1549, %v2096, -1e+30
    %v2101 = vsel %vm1560, %v2099, -inf
    %2102 = vmax.xlane.f32.xlu0 %v2101
    %v2103 = vpop.xlane.xlu0 %2102
    %v2104 = vsel %vm1560, %v2100, -inf
    %2105 = vmax.xlane.f32.xlu0 %v2104
    %v2106 = vpop.xlane.xlu0 %2105
    %v2107 = vmax.f32 %v2103, 0.0
    %v2108 = vmax.f32 %v2106, 0.0
    %v2109 = vsub.f32 %v2099, %v2107
    %v2110 = vsub.f32 %v2100, %v2108
    %v2111 = vmul.f32 %v2109, 1.442695
    %v2112 = vpow.pop %v2111
    %v2113 = vmul.f32 %v2110, 1.442695
    %v2114 = vpow.pop %v2113
    %v2115 = vpack.c.bf16 %v2114, %v2112
    %2116 = vmatpush.bf16.msra.mxu0 0
    %2117 = vmatpush.bf16.msra.mxu0 0
    %2118 = vmatpush.bf16.msra.mxu0 0
    %2119 = vmatpush.bf16.msra.mxu0 0
    %2120 = vmatpush.bf16.msra.mxu0 0
    %2121 = vmatpush.bf16.msra.mxu0 0
    %2122 = vmatpush.bf16.msra.mxu0 0
    %2123 = vmatpush.bf16.msra.mxu0 %v1872
    %2124 = vmatmul.bf16.gmra.mxu0 %v1597
    %v2125 = vpop.f32.mrf.mxu0
    %v2126 = vadd.f32 0.0, %v2125
    %v2127 = vpop.f32.mrf.mxu0
    %v2128 = vadd.f32 0.0, %v2127
    %2129 = vmatmul.bf16.gmra.mxu0 %v1600
    %v2130 = vpop.f32.mrf.mxu0
    %v2131 = vadd.f32 0.0, %v2130
    %v2132 = vpop.f32.mrf.mxu0
    %v2133 = vadd.f32 0.0, %v2132
    %2134 = vmatmul.bf16.gmra.mxu0 %v1603
    %v2135 = vpop.f32.mrf.mxu0
    %v2136 = vadd.f32 0.0, %v2135
    %v2137 = vpop.f32.mrf.mxu0
    %v2138 = vadd.f32 0.0, %v2137
    %2139 = vmatmul.bf16.gmra.mxu0 %v1606
    %v2140 = vpop.f32.mrf.mxu0
    %v2141 = vadd.f32 0.0, %v2140
    %v2142 = vpop.f32.mrf.mxu0
    %v2143 = vadd.f32 0.0, %v2142
    %2144 = vdwg.mxu0
    %v2145 = vpack.c.bf16 %v2126, %v2126
    %v2146 = vpack.c.bf16 %v2128, %v2128
    %v2147 = vpack.c.bf16 %v2131, %v2131
    %v2148 = vpack.c.bf16 %v2133, %v2133
    %v2149 = vpack.c.bf16 %v2136, %v2136
    %v2150 = vpack.c.bf16 %v2138, %v2138
    %v2151 = vpack.c.bf16 %v2141, %v2141
    %v2152 = vpack.c.bf16 %v2143, %v2143
    %v2153 = vunpack.c.l.bf16 %v2145
    %v2154 = vunpack.c.l.bf16 %v2146
    %v2155 = vunpack.c.l.bf16 %v2147
    %v2156 = vunpack.c.l.bf16 %v2148
    %v2157 = vunpack.c.l.bf16 %v2149
    %v2158 = vunpack.c.l.bf16 %v2150
    %v2159 = vunpack.c.l.bf16 %v2151
    %v2160 = vunpack.c.l.bf16 %v2152
    %v2161 = vmul.f32 %v2153, %v1653
    %v2162 = vmul.f32 %v2154, %v1654
    %v2163 = vmul.f32 %v2155, %v1655
    %v2164 = vmul.f32 %v2156, %v1656
    %v2165 = vmul.f32 %v2157, %v1657
    %v2166 = vmul.f32 %v2158, %v1658
    %v2167 = vmul.f32 %v2159, %v1659
    %v2168 = vmul.f32 %v2160, %v1660
    %v2169 = vpack.c.bf16 %v2162, %v2161
    %v2170 = vpack.c.bf16 %v2164, %v2163
    %v2171 = vpack.c.bf16 %v2166, %v2165
    %v2172 = vpack.c.bf16 %v2168, %v2167
    %v2174 = vsel %vm1560, %v2115, 0
    %2176 = vmatpush.bf16.msra.mxu0 0
    %2177 = vmatpush.bf16.msra.mxu0 0
    %2178 = vmatpush.bf16.msra.mxu0 0
    %2179 = vmatpush.bf16.msra.mxu0 0
    %2180 = vmatpush.bf16.msra.mxu0 %v2172
    %2181 = vmatpush.bf16.msra.mxu0 %v2171
    %2182 = vmatpush.bf16.msra.mxu0 %v2170
    %2183 = vmatpush.bf16.msra.mxu0 %v2169
    %2184 = vmatmul.bf16.gmra.mxu0 %v2174
    %v2185 = vpop.f32.mrf.mxu0
    %v2186 = vadd.f32 0.0, %v2185
    %v2187 = vpop.f32.mrf.mxu0
    %v2188 = vadd.f32 0.0, %v2187
    %2189 = vdwg.mxu0
    %2190 = vmatpush.bf16.msra.mxu0 0
    %2191 = vmatpush.bf16.msra.mxu0 0
    %2192 = vmatpush.bf16.msra.mxu0 0
    %2193 = vmatpush.bf16.msra.mxu0 0
    %2194 = vmatpush.bf16.msra.mxu0 %v1709
    %2195 = vmatpush.bf16.msra.mxu0 %v1708
    %2196 = vmatpush.bf16.msra.mxu0 %v1707
    %2197 = vmatpush.bf16.msra.mxu0 %v1706
    %2198 = vmatmul.bf16.gmra.mxu0 %v2174
    %v2199 = vpop.f32.mrf.mxu0
    %v2200 = vadd.f32 0.0, %v2199
    %v2201 = vpop.f32.mrf.mxu0
    %v2202 = vadd.f32 0.0, %v2201
    %2203 = vdwg.mxu0
    %vm2204 = vcmp.gt.f32.partialorder %v2200, 0.0
    %vm2205 = vcmp.gt.f32.partialorder %v2202, 0.0
    %v2206 = vsel %vm2204, %v2200, 1.0
    %v2207 = vsel %vm2205, %v2202, 1.0
    %v2208 = vrcp.pop %v2206
    %v2209 = vrcp.pop %v2207
    %v2210 = vmul.f32 %v2186, %v2208
    %v2211 = vmul.f32 %v2188, %v2209
    %v2212 = vadd.f32 %v1868, %v2210
    %v2213 = vadd.f32 %v1870, %v2211
    %v2214 = vmax.f32 %v2212, 0.0
    %v2215 = vmax.f32 %v2213, 0.0
    %v2216 = vpack.c.bf16 %v2215, %v2214
    %v2217 = vld [vmem:[#allocation2 + $0x100] sm:$0xff]
    %v2218 = vld [vmem:[#allocation2 + $0x108] sm:$0xff]
    %v2219 = vld [vmem:[#allocation2 + $0x110] sm:$0xff]
    %v2220 = vld [vmem:[#allocation2 + $0x118] sm:$0xff]
    %v2221 = vld [vmem:[#allocation2 + $0x120] sm:$0xff]
    %v2222 = vld [vmem:[#allocation2 + $0x128] sm:$0xff]
    %v2223 = vld [vmem:[#allocation2 + $0x130] sm:$0xff]
    %v2224 = vld [vmem:[#allocation2 + $0x138] sm:$0xff]
    %v2225 = vld [vmem:[#allocation2 + $0x140] sm:$0xff]
    %v2226 = vld [vmem:[#allocation2 + $0x148] sm:$0xff]
    %v2227 = vld [vmem:[#allocation2 + $0x150] sm:$0xff]
    %v2228 = vld [vmem:[#allocation2 + $0x158] sm:$0xff]
    %v2229 = vld [vmem:[#allocation2 + $0x160] sm:$0xff]
    %v2230 = vld [vmem:[#allocation2 + $0x168] sm:$0xff]
    %v2231 = vld [vmem:[#allocation2 + $0x170] sm:$0xff]
    %v2232 = vld [vmem:[#allocation2 + $0x178] sm:$0xff]
    %s2233 = scalar_lea.vmem %s4, 32
    %v2234 = vld [vmem:[%s2233] ss:$8 sm:$0x3]
    %v2236 = vperm.slane %v2234, 0
    %v2237 = vperm.slane %v2234, 1
    %v2256 = vunpack.c.l.b16 %v2217
    %v2257 = vunpack.c.h.b16 %v2217
    %v2258 = vunpack.c.l.b16 %v2218
    %v2259 = vunpack.c.h.b16 %v2218
    %v2260 = vunpack.c.l.b16 %v2219
    %v2261 = vunpack.c.h.b16 %v2219
    %v2262 = vunpack.c.l.b16 %v2220
    %v2263 = vunpack.c.h.b16 %v2220
    %v2264 = vunpack.c.l.b16 %v2221
    %v2265 = vunpack.c.h.b16 %v2221
    %v2266 = vunpack.c.l.b16 %v2222
    %v2267 = vunpack.c.h.b16 %v2222
    %v2268 = vunpack.c.l.b16 %v2223
    %v2269 = vunpack.c.h.b16 %v2223
    %v2270 = vunpack.c.l.b16 %v2224
    %v2271 = vunpack.c.h.b16 %v2224
    %v2272 = vunpack.c.l.b16 %v2225
    %v2273 = vunpack.c.h.b16 %v2225
    %v2274 = vunpack.c.l.b16 %v2226
    %v2275 = vunpack.c.h.b16 %v2226
    %v2276 = vunpack.c.l.b16 %v2227
    %v2277 = vunpack.c.h.b16 %v2227
    %v2278 = vunpack.c.l.b16 %v2228
    %v2279 = vunpack.c.h.b16 %v2228
    %v2280 = vunpack.c.l.b16 %v2229
    %v2281 = vunpack.c.h.b16 %v2229
    %v2282 = vunpack.c.l.b16 %v2230
    %v2283 = vunpack.c.h.b16 %v2230
    %v2284 = vunpack.c.l.b16 %v2231
    %v2285 = vunpack.c.h.b16 %v2231
    %v2286 = vunpack.c.l.b16 %v2232
    %v2287 = vunpack.c.h.b16 %v2232
    %v2288 = vpack.c.b16 %v2258, %v2256
    %v2289 = vpack.c.b16 %v2259, %v2257
    %v2290 = vpack.c.b16 %v2262, %v2260
    %v2291 = vpack.c.b16 %v2263, %v2261
    %v2292 = vpack.c.b16 %v2266, %v2264
    %v2293 = vpack.c.b16 %v2267, %v2265
    %v2294 = vpack.c.b16 %v2270, %v2268
    %v2295 = vpack.c.b16 %v2271, %v2269
    %v2296 = vpack.c.b16 %v2274, %v2272
    %v2297 = vpack.c.b16 %v2275, %v2273
    %v2298 = vpack.c.b16 %v2278, %v2276
    %v2299 = vpack.c.b16 %v2279, %v2277
    %v2300 = vpack.c.b16 %v2282, %v2280
    %v2301 = vpack.c.b16 %v2283, %v2281
    %v2302 = vpack.c.b16 %v2286, %v2284
    %v2303 = vpack.c.b16 %v2287, %v2285
    %2320 = vmatpush.bf16.msra.mxu0 %v2302
    %2321 = vmatpush.bf16.msra.mxu0 %v2300
    %2322 = vmatpush.bf16.msra.mxu0 %v2298
    %2323 = vmatpush.bf16.msra.mxu0 %v2296
    %2324 = vmatpush.bf16.msra.mxu0 %v2294
    %2325 = vmatpush.bf16.msra.mxu0 %v2292
    %2326 = vmatpush.bf16.msra.mxu0 %v2290
    %2327 = vmatpush.bf16.msra.mxu0 %v2288
    %2328 = vmatmul.bf16.gmra.mxu0 %v2216
    %v2329 = vpop.f32.mrf.mxu0
    %v2330 = vadd.f32 %v2236, %v2329
    %v2331 = vpop.f32.mrf.mxu0
    %v2332 = vadd.f32 %v2236, %v2331
    %2333 = vdwg.mxu0
    %2334 = vmatpush.bf16.msra.mxu0 %v2303
    %2335 = vmatpush.bf16.msra.mxu0 %v2301
    %2336 = vmatpush.bf16.msra.mxu0 %v2299
    %2337 = vmatpush.bf16.msra.mxu0 %v2297
    %2338 = vmatpush.bf16.msra.mxu0 %v2295
    %2339 = vmatpush.bf16.msra.mxu0 %v2293
    %2340 = vmatpush.bf16.msra.mxu0 %v2291
    %2341 = vmatpush.bf16.msra.mxu0 %v2289
    %2342 = vmatmul.bf16.gmra.mxu0 %v2216
    %v2343 = vpop.f32.mrf.mxu0
    %v2344 = vadd.f32 %v2237, %v2343
    %v2345 = vpop.f32.mrf.mxu0
    %v2346 = vadd.f32 %v2237, %v2345
    %2347 = vdwg.mxu0
    %v2348 = vpack.c.bf16 %v2332, %v2330
    %v2349 = vld [vmem:[#allocation4 + $0x80] sm:$0xf]
    %v2350 = vld [vmem:[#allocation4 + $0x84] sm:$0xf]
    %v2351 = vld [vmem:[#allocation4 + $0x88] sm:$0xf]
    %v2352 = vld [vmem:[#allocation4 + $0x8c] sm:$0xf]
    %v2353 = vld [vmem:[#allocation4 + $0x90] sm:$0xf]
    %v2354 = vld [vmem:[#allocation4 + $0x94] sm:$0xf]
    %v2355 = vld [vmem:[#allocation4 + $0x98] sm:$0xf]
    %v2356 = vld [vmem:[#allocation4 + $0x9c] sm:$0xf]
    %v2357 = vld [vmem:[#allocation4 + $0xa0] sm:$0xf]
    %v2358 = vld [vmem:[#allocation4 + $0xa4] sm:$0xf]
    %v2359 = vld [vmem:[#allocation4 + $0xa8] sm:$0xf]
    %v2360 = vld [vmem:[#allocation4 + $0xac] sm:$0xf]
    %v2361 = vld [vmem:[#allocation4 + $0xb0] sm:$0xf]
    %v2362 = vld [vmem:[#allocation4 + $0xb4] sm:$0xf]
    %v2363 = vld [vmem:[#allocation4 + $0xb8] sm:$0xf]
    %v2364 = vld [vmem:[#allocation4 + $0xbc] sm:$0xf]
    %v2381 = vunpack.c.l.b16 %v2349
    %v2382 = vunpack.c.l.b16 %v2350
    %v2383 = vunpack.c.l.b16 %v2351
    %v2384 = vunpack.c.l.b16 %v2352
    %v2385 = vunpack.c.l.b16 %v2353
    %v2386 = vunpack.c.l.b16 %v2354
    %v2387 = vunpack.c.l.b16 %v2355
    %v2388 = vunpack.c.l.b16 %v2356
    %v2389 = vunpack.c.l.b16 %v2357
    %v2390 = vunpack.c.l.b16 %v2358
    %v2391 = vunpack.c.l.b16 %v2359
    %v2392 = vunpack.c.l.b16 %v2360
    %v2393 = vunpack.c.l.b16 %v2361
    %v2394 = vunpack.c.l.b16 %v2362
    %v2395 = vunpack.c.l.b16 %v2363
    %v2396 = vunpack.c.l.b16 %v2364
    %v2397 = vpack.c.b16 %v2382, %v2381
    %v2398 = vpack.c.b16 %v2384, %v2383
    %v2399 = vpack.c.b16 %v2386, %v2385
    %v2400 = vpack.c.b16 %v2388, %v2387
    %v2401 = vpack.c.b16 %v2390, %v2389
    %v2402 = vpack.c.b16 %v2392, %v2391
    %v2403 = vpack.c.b16 %v2394, %v2393
    %v2404 = vpack.c.b16 %v2396, %v2395
    %2413 = vmatpush.bf16.msra.mxu0 %v2404
    %2414 = vmatpush.bf16.msra.mxu0 %v2403
    %2415 = vmatpush.bf16.msra.mxu0 %v2402
    %2416 = vmatpush.bf16.msra.mxu0 %v2401
    %2417 = vmatpush.bf16.msra.mxu0 %v2400
    %2418 = vmatpush.bf16.msra.mxu0 %v2399
    %2419 = vmatpush.bf16.msra.mxu0 %v2398
    %2420 = vmatpush.bf16.msra.mxu0 %v2397
    %2421 = vmatmul.bf16.gmra.mxu0 %v2348
    %v2422 = vpop.f32.mrf.mxu0
    %v2423 = vadd.f32 0.0, %v2422
    %v2424 = vpop.f32.mrf.mxu0
    %v2425 = vadd.f32 0.0, %v2424
    %2426 = vdwg.mxu0
    %v2427 = vpack.c.bf16 %v2425, %v2423
    %2428 = vmatpush.bf16.msra.mxu0 0
    %2429 = vmatpush.bf16.msra.mxu0 0
    %2430 = vmatpush.bf16.msra.mxu0 0
    %2431 = vmatpush.bf16.msra.mxu0 0
    %2432 = vmatpush.bf16.msra.mxu0 0
    %2433 = vmatpush.bf16.msra.mxu0 0
    %2434 = vmatpush.bf16.msra.mxu0 0
    %2435 = vmatpush.bf16.msra.mxu0 %v2427
    %2436 = vmatmul.bf16.gmra.mxu0 %v1444
    %v2437 = vpop.f32.mrf.mxu0
    %v2438 = vadd.f32 0.0, %v2437
    %v2439 = vpop.f32.mrf.mxu0
    %v2440 = vadd.f32 0.0, %v2439
    %2441 = vmatmul.bf16.gmra.mxu0 %v1447
    %v2442 = vpop.f32.mrf.mxu0
    %v2443 = vadd.f32 0.0, %v2442
    %v2444 = vpop.f32.mrf.mxu0
    %v2445 = vadd.f32 0.0, %v2444
    %2446 = vmatmul.bf16.gmra.mxu0 %v1450
    %v2447 = vpop.f32.mrf.mxu0
    %v2448 = vadd.f32 0.0, %v2447
    %v2449 = vpop.f32.mrf.mxu0
    %v2450 = vadd.f32 0.0, %v2449
    %2451 = vdwg.mxu0
    %v2452 = vadd.f32 %v1200, %v2438
    %v2453 = vadd.f32 %v1202, %v2440
    %v2454 = vadd.f32 %v1205, %v2443
    %v2455 = vadd.f32 %v1207, %v2445
    %v2456 = vadd.f32 %v1210, %v2448
    %v2457 = vadd.f32 %v1212, %v2450
    %v2458 = vpack.c.bf16 %v2452, %v2452
    %v2459 = vpack.c.bf16 %v2453, %v2453
    %v2460 = vpack.c.bf16 %v2454, %v2454
    %v2461 = vpack.c.bf16 %v2455, %v2455
    %v2462 = vpack.c.bf16 %v2456, %v2456
    %v2463 = vpack.c.bf16 %v2457, %v2457
    %v2464 = vunpack.c.l.bf16 %v2458
    %v2465 = vunpack.c.l.bf16 %v2459
    %v2466 = vunpack.c.l.bf16 %v2460
    %v2467 = vunpack.c.l.bf16 %v2461
    %v2468 = vunpack.c.l.bf16 %v2462
    %v2469 = vunpack.c.l.bf16 %v2463
    %v2470 = vunpack.c.l.bf16 %v81
    %v2471 = vunpack.c.l.bf16 %v82
    %v2472 = vunpack.c.l.bf16 %v83
    %v2473 = vunpack.c.l.bf16 %v84
    %v2474 = vunpack.c.l.bf16 %v85
    %v2475 = vunpack.c.l.bf16 %v86
    %v2476 = vmul.f32 %v2464, %v2470
    %v2477 = vmul.f32 %v2465, %v2471
    %v2478 = vmul.f32 %v2466, %v2472
    %v2479 = vmul.f32 %v2467, %v2473
    %v2480 = vmul.f32 %v2468, %v2474
    %v2481 = vmul.f32 %v2469, %v2475
    %v2482 = vpack.c.bf16 %v2477, %v2476
    %v2483 = vpack.c.bf16 %v2479, %v2478
    %v2484 = vpack.c.bf16 %v2481, %v2480
    %2485 = vmatpush.bf16.msra.mxu0 0
    %2486 = vmatpush.bf16.msra.mxu0 0
    %2487 = vmatpush.bf16.msra.mxu0 0
    %2488 = vmatpush.bf16.msra.mxu0 0
    %2489 = vmatpush.bf16.msra.mxu0 0
    %2490 = vmatpush.bf16.msra.mxu0 %v2484
    %2491 = vmatpush.bf16.msra.mxu0 %v2483
    %2492 = vmatpush.bf16.msra.mxu0 %v2482
    %2493 = vmatmul.bf16.gmra.mxu0 %v1516
    %v2494 = vpop.f32.mrf.mxu0
    %v2495 = vadd.f32 0.0, %v2494
    %v2496 = vpop.f32.mrf.mxu0
    %v2497 = vadd.f32 0.0, %v2496
    %2498 = vdwg.mxu0
    %2501 = vrot.lane.b32.xlu0 %v2495, 16
    %v2502 = vpop.permute.xlu0 %2501
    %2503 = vrot.lane.b32.xlu0 %v2497, 16
    %v2504 = vpop.permute.xlu0 %2503
    %v2507 = vadd.f32 %v2423, %v2502
    %v2508 = vadd.f32 %v2425, %v2504
    %v2509 = vmul.f32 %v2507, 0.2
    %v2510 = vmul.f32 %v2508, 0.2
    %v2511 = vmax.f32 %v2507, %v2509
    %v2512 = vmax.f32 %v2508, %v2510
    %2515 = vrot.lane.b32.xlu0 %v2511, 112
    %v2516 = vpop.permute.xlu0 %2515
    %2517 = vrot.lane.b32.xlu0 %v2512, 112
    %v2518 = vpop.permute.xlu0 %2517
    %v2521 = vsel %vm1548, %v2516, -1e+30
    %v2522 = vsel %vm1549, %v2518, -1e+30
    %v2523 = vsel %vm1442, %v2521, -inf
    %2524 = vmax.xlane.f32.xlu0 %v2523
    %v2525 = vpop.xlane.xlu0 %2524
    %v2526 = vsel %vm1442, %v2522, -inf
    %2527 = vmax.xlane.f32.xlu0 %v2526
    %v2528 = vpop.xlane.xlu0 %2527
    %v2529 = vmax.f32 %v2525, 0.0
    %v2530 = vmax.f32 %v2528, 0.0
    %v2531 = vsub.f32 %v2521, %v2529
    %v2532 = vsub.f32 %v2522, %v2530
    %v2533 = vmul.f32 %v2531, 1.442695
    %v2534 = vpow.pop %v2533
    %v2535 = vmul.f32 %v2532, 1.442695
    %v2536 = vpow.pop %v2535
    %v2537 = vpack.c.bf16 %v2536, %v2534
    %v2538 = vsel %vm1442, %v2534, 0.0
    %2539 = vadd.xlane.f32.xlu0 %v2538
    %v2540 = vpop.xlane.xlu0 %2539
    %v2541 = vsel %vm1442, %v2536, 0.0
    %2542 = vadd.xlane.f32.xlu0 %v2541
    %v2543 = vpop.xlane.xlu0 %2542
    %v2545 = vsel %vm1442, %v2537, 0
    %2547 = vmatpush.bf16.msra.mxu0 0
    %2548 = vmatpush.bf16.msra.mxu0 0
    %2549 = vmatpush.bf16.msra.mxu0 0
    %2550 = vmatpush.bf16.msra.mxu0 0
    %2551 = vmatpush.bf16.msra.mxu0 0
    %2552 = vmatpush.bf16.msra.mxu0 0
    %2553 = vmatpush.bf16.msra.mxu0 0
    %2554 = vmatpush.bf16.msra.mxu0 %v2348
    %2555 = vmatmul.bf16.gmra.mxu0 %v2545
    %v2556 = vpop.f32.mrf.mxu0
    %v2557 = vadd.f32 0.0, %v2556
    %v2558 = vpop.f32.mrf.mxu0
    %v2559 = vadd.f32 0.0, %v2558
    %2560 = vdwg.mxu0
    %vm2561 = vcmp.gt.f32.partialorder %v2540, 0.0
    %vm2562 = vcmp.gt.f32.partialorder %v2543, 0.0
    %v2563 = vsel %vm2561, %v2540, 1.0
    %v2564 = vsel %vm2562, %v2543, 1.0
    %v2565 = vrcp.pop %v2563
    %v2566 = vrcp.pop %v2564
    %v2567 = vmul.f32 %v2557, %v2565
    %v2568 = vmul.f32 %v2559, %v2566
    %v2569 = vadd.f32 %v2344, %v2567
    %v2570 = vadd.f32 %v2346, %v2568
    %v2571 = vmax.f32 %v2569, 0.0
    %v2572 = vmax.f32 %v2570, 0.0
    %2573 = vst [vmem:[%s8] sm:$0xff] %v2571
    %2574 = vst [vmem:[%s8 + $0x8] sm:$0xff] %v2572
    // Predicated region
    $region46: #{net_forward.1} parent=1 // pred_check
      _
    $region47: #{net_forward.1} parent=1 // pred_check_branch
      %2576 = sbr.rel (0) target = $region49
    $region48: #{net_forward.1} parent=1 // pred_region
      _
    $region49: #{net_forward.1} parent=1 // pred_fallthru
      _
    // Predicated region
    $region50: #{net_forward.1} parent=1 // pred_check
      _
    $region51: #{net_forward.1} parent=1 // pred_check_branch
      %2578 = sbr.rel (0) target = $region53
    $region52: #{net_forward.1} parent=1 // pred_region
      _
    $region53: #{net_forward.1} parent=1 // pred_fallthru
      _
    %2579 = vsyncpa [#allocation3], 1
    %2580 = vsyncpa [#allocation5], 1

</llo_original>
